<compile_context>
chip_gen: v7x
topology: tpu7x:2x2x1
jax: 0.10.0
libtpu: 0.0.40
codegen_flags: <defaults>
</compile_context>

<pallas_src>
import jax
import jax.numpy as jnp
from jax.experimental import pallas as pl
from jax.experimental.pallas import tpu as pltpu


def ssl_loss_kernel(x_ref, est_ref, w1_ref, b1_ref, w2_ref, out_ref, h_acc):
    # x_ref:   (B, tk)      bf16 time-slice of the mixture
    # est_ref: (2, B, tk)   bf16 time-slice of both estimated sources (leading-dim views)
    # w1_ref:  (3, tk, tH)  bf16 row-slab of layer-1 weights, one slab per concat segment
    # b1_ref:  (1, tH) f32; w2_ref: (1, tH) f32 (second layer as a broadcast row)
    # out_ref: (1, 8, 128) f32 lane-dense tile carrying this H-block's partial sum
    # h_acc:   (B, tH) f32 scratch accumulator, resident across the k grid axis
    k = pl.program_id(1)

    @pl.when(k == 0)
    def _init():
        h_acc[...] = jnp.zeros_like(h_acc)

    # No lane-axis concat: each segment hits the MXU as a partial matmul against
    # the matching w1 slab (identical math to cat @ w1, zero relayout copies).
    # bf16 operands, f32 accumulation.
    h_acc[...] += (
        jnp.dot(x_ref[...], w1_ref[0], preferred_element_type=jnp.float32)
        + jnp.dot(est_ref[0], w1_ref[1], preferred_element_type=jnp.float32)
        + jnp.dot(est_ref[1], w1_ref[2], preferred_element_type=jnp.float32)
    )

    @pl.when(k == pl.num_programs(1) - 1)
    def _finalize():
        # f32 epilogue (v5e VPU/EUP have no bf16 path).
        h = jnp.maximum(h_acc[...] + b1_ref[...], 0.0)        # (B, tH)
        # Fused second layer: this H-block's contribution to sum_b (h_b . w2).
        partial = jnp.sum(h * w2_ref[...])
        # Lane-dense (8,128) broadcast write; wrapper reads [h, 0, 0].
        out_ref[...] = jnp.full(out_ref.shape, partial, jnp.float32)


def _pick_vmem_limit():
    """~60% of physical VMEM: ≈77 MiB on v5e/v6e (128 MiB), ≈38 MiB on v7x (64 MiB)."""
    try:
        phys = int(pltpu.get_tpu_info().vmem_capacity_bytes)
    except Exception:
        phys = 64 * 1024 * 1024
    return int(phys * 0.6)


def _pick_tk(T, tH, vmem_limit):
    """Largest K tile whose double-buffered bf16 w1 slab fits the VMEM budget."""
    w1_buf_budget = vmem_limit // 4          # per-buffer slab budget (2x buffered + activations + headroom)
    tk_max = max(128, w1_buf_budget // (3 * tH * 2))   # bf16 slab = 3*tk*tH*2 bytes
    if T <= tk_max:
        return T                              # whole time axis in one slab
    tk = (tk_max // 128) * 128
    while tk > 128 and T % tk != 0:
        tk -= 128
    return tk


def ssl_loss_forward(x, est_targets, w1, b1, w2, b2, *, tk=None, tH=None):
    """loss = -mean(ssl_model(cat(x, est1, est2))) with a 2-layer MLP ssl_model."""
    B, T = x.shape
    H = w1.shape[1]
    assert w1.shape == (3 * T, H) and est_targets.shape == (B, 2, T)

    # Hidden-dim tiling: split H into two blocks when large enough so the
    # "parallel" grid axis can shard the weight stream across v7x's two TCs.
    if tH is None:
        tH = H // 2 if (H >= 256 and (H // 2) % 128 == 0) else H
    assert H % tH == 0 and (tH == H or tH % 128 == 0)
    n_h = H // tH

    vmem_limit = _pick_vmem_limit()
    if tk is None:
        tk = _pick_tk(T, tH, vmem_limit)
    # TODO(synk): ragged T needs zero-padding of the time axis (zeros contribute 0).
    assert T % tk == 0 and (tk == T or tk % 128 == 0), "T must tile into 128-multiples"
    n_k = T // tk

    # Input prep (all layout plumbing, done once outside the kernel):
    #  * activations cast to bf16 (halves HBM->VMEM bytes; MXU accumulates f32)
    #  * est_targets relaid out to (2, B, T) for free leading-dim segment views
    #  * w1 (3T, H) -> (3, T, H): one bf16 row-slab per concat segment
    x_bf = x.astype(jnp.bfloat16)
    est_sbt = jnp.transpose(est_targets, (1, 0, 2)).astype(jnp.bfloat16)   # (2, B, T)
    w1_seg = w1.reshape(3, T, H).astype(jnp.bfloat16)
    b1_row = b1.reshape(1, H).astype(jnp.float32)
    w2_row = w2.reshape(1, H).astype(jnp.float32)

    grid_spec = pltpu.PrefetchScalarGridSpec(
        num_scalar_prefetch=0,
        grid=(n_h, n_k),                                       # reduction axis (k) last
        in_specs=[
            pl.BlockSpec((B, tk), lambda h, k: (0, k)),        # x slice
            pl.BlockSpec((2, B, tk), lambda h, k: (0, 0, k)),  # est slices (leading-dim views)
            pl.BlockSpec((3, tk, tH), lambda h, k: (0, k, h)), # w1 slabs
            pl.BlockSpec((1, tH), lambda h, k: (0, h)),        # b1 block
            pl.BlockSpec((1, tH), lambda h, k: (0, h)),        # w2 row block
        ],
        out_specs=pl.BlockSpec((1, 8, 128), lambda h, k: (h, 0, 0)),   # per-H-block partial (lane-dense)
        scratch_shapes=[pltpu.VMEM((B, tH), jnp.float32)],     # resident f32 accumulator
    )

    partials = pl.pallas_call(
        ssl_loss_kernel,
        out_shape=jax.ShapeDtypeStruct((n_h, 8, 128), jnp.float32),
        grid_spec=grid_spec,
        compiler_params=pltpu.CompilerParams(
            # h: independent H blocks (megacore-shardable); k: reduction axis.
            dimension_semantics=("parallel", "arbitrary"),
            vmem_limit_bytes=vmem_limit,
        ),
    )(x_bf, est_sbt, w1_seg, b1_row, w2_row)

    # Scalar epilogue in the wrapper (keeps lane-sparse scalars out of the kernel):
    # -mean(h @ w2 + b2) = -(sum_h_blocks(partial)/B + b2)
    total = jnp.sum(partials[:, 0, 0])
    return -(total / B + b2.reshape(()))


if __name__ == "__main__":
    # Small demo shapes: H=256 exercises the parallel H-block axis (n_h=2); the
    # auto tile covers T in one slab, and an explicit tk=256 run exercises the
    # K-grid accumulator path.
    B, T, H = 8, 1024, 256

    key = jax.random.PRNGKey(0)
    kx, ke, kw1, kb1, kw2, kb2 = jax.random.split(key, 6)

    x = jax.random.normal(kx, (B, T), dtype=jnp.float32)               # input mixture
    est_targets = jax.random.normal(ke, (B, 2, T), dtype=jnp.float32)  # 2 estimated sources

    # deterministic synthetic ssl_model parameters
    w1 = jax.random.normal(kw1, (3 * T, H), dtype=jnp.float32) * 0.02
    b1 = jax.random.normal(kb1, (1, H), dtype=jnp.float32) * 0.01
    w2 = jax.random.normal(kw2, (H, 1), dtype=jnp.float32) * 0.02
    b2 = jax.random.normal(kb2, (1, 1), dtype=jnp.float32) * 0.01

    loss = ssl_loss_forward(x, est_targets, w1, b1, w2, b2)            # auto tk (single slab)
    loss_tiled = ssl_loss_forward(x, est_targets, w1, b1, w2, b2, tk=256)  # forced K-grid path
    jax.block_until_ready((loss, loss_tiled))

    # Reference matching the kernel's precision regime (bf16 matmul operands,
    # f32 accumulation + epilogue).
    cat = jnp.concatenate([x, est_targets[:, 0, :], est_targets[:, 1, :]], axis=1)
    h_ref = jnp.maximum(
        jnp.dot(cat.astype(jnp.bfloat16), w1.astype(jnp.bfloat16),
                preferred_element_type=jnp.float32) + b1, 0.0)
    ref_bf16 = -jnp.mean(h_ref @ w2 + b2)
    assert jnp.allclose(loss, ref_bf16, rtol=1e-2, atol=1e-4), (loss, ref_bf16)
    assert jnp.allclose(loss_tiled, ref_bf16, rtol=1e-2, atol=1e-4), (loss_tiled, ref_bf16)

    # Loose sanity check against the pure-f32 module math.
    ref_f32 = -jnp.mean(jnp.maximum(cat @ w1 + b1, 0.0) @ w2 + b2)
    assert jnp.allclose(loss, ref_f32, rtol=1e-1, atol=5e-3), (loss, ref_f32)

    print("KERNEL_OK")
</pallas_src>

<mosaic_0001>
module attributes {stable_mosaic.version = 11 : i64} {
  func.func @ssl_loss_kernel(%arg0: i32, %arg1: i32, %arg2: memref<8x1024xbf16, #tpu.memory_space<vmem>>, %arg3: memref<2x8x1024xbf16, #tpu.memory_space<vmem>>, %arg4: memref<3x1024x128xbf16, #tpu.memory_space<vmem>>, %arg5: memref<1x128xf32, #tpu.memory_space<vmem>>, %arg6: memref<1x128xf32, #tpu.memory_space<vmem>>, %arg7: memref<1x8x128xf32, #tpu.memory_space<vmem>>, %arg8: memref<8x128xf32, #tpu.memory_space<vmem>>) attributes {dimension_semantics = [#tpu.dimension_semantics<parallel>, #tpu.dimension_semantics<arbitrary>], iteration_bounds = array<i64: 2, 1>, scalar_prefetch = 0 : i64, scratch_operands = 1 : i64, tpu.core_type = #tpu.core_type<tc>, window_params = [{transform_indices = @transform_0, window_bounds = array<i64: 8, 1024>}, {transform_indices = @transform_1, window_bounds = array<i64: 2, 8, 1024>}, {transform_indices = @transform_2, window_bounds = array<i64: 3, 1024, 128>}, {transform_indices = @transform_3, window_bounds = array<i64: 1, 128>}, {transform_indices = @transform_4, window_bounds = array<i64: 1, 128>}, {transform_indices = @transform_5, window_bounds = array<i64: 1, 8, 128>}]} {
    %c0_i32 = arith.constant 0 : i32
    %0 = arith.cmpi eq, %arg1, %c0_i32 : i32
    %1 = arith.extui %0 : i1 to i32
    %c0_i32_0 = arith.constant 0 : i32
    %2 = arith.cmpi ne, %1, %c0_i32_0 : i32
    scf.if %2 {
      %cst_23 = arith.constant 0.000000e+00 : f32
      %25 = vector.broadcast %cst_23 : f32 to vector<8x128xf32>
      %c0_24 = arith.constant 0 : index
      %c0_25 = arith.constant 0 : index
      %26 = vector.load %arg8[%c0_24, %c0_25] : memref<8x128xf32, #tpu.memory_space<vmem>>, vector<8x128xf32>
      tpu.vector_store %arg8[%c0_24, %c0_25], %25 {strides = array<i32>} : memref<8x128xf32, #tpu.memory_space<vmem>>, vector<8x128xf32>,
    } else {
    }
    %c0 = arith.constant 0 : index
    %c0_1 = arith.constant 0 : index
    %3 = vector.load %arg8[%c0, %c0_1] : memref<8x128xf32, #tpu.memory_space<vmem>>, vector<8x128xf32>
    %c0_2 = arith.constant 0 : index
    %c0_3 = arith.constant 0 : index
    %4 = vector.load %arg2[%c0_2, %c0_3] : memref<8x1024xbf16, #tpu.memory_space<vmem>>, vector<8x1024xbf16>
    %c0_4 = arith.constant 0 : index
    %c0_5 = arith.constant 0 : index
    %c0_6 = arith.constant 0 : index
    %5 = vector.load %arg4[%c0_4, %c0_5, %c0_6] : memref<3x1024x128xbf16, #tpu.memory_space<vmem>>, vector<1x1024x128xbf16>
    %6 = vector.shape_cast %5 : vector<1x1024x128xbf16> to vector<1024x128xbf16>
    %cst = arith.constant dense<0.000000e+00> : vector<8x128xf32>
    %7 = tpu.matmul %4, %6, %cst {dimension_numbers = #tpu.dot_dimension_numbers<[1], [0], [0], [1], [0, 0, 1, 1], [], []>} : vector<8x1024xbf16>, vector<1024x128xbf16>, vector<8x128xf32> -> vector<8x128xf32>
    %c0_7 = arith.constant 0 : index
    %c0_8 = arith.constant 0 : index
    %c0_9 = arith.constant 0 : index
    %8 = vector.load %arg3[%c0_7, %c0_8, %c0_9] : memref<2x8x1024xbf16, #tpu.memory_space<vmem>>, vector<1x8x1024xbf16>
    %9 = vector.shape_cast %8 : vector<1x8x1024xbf16> to vector<8x1024xbf16>
    %c1 = arith.constant 1 : index
    %c0_10 = arith.constant 0 : index
    %c0_11 = arith.constant 0 : index
    %10 = vector.load %arg4[%c1, %c0_10, %c0_11] : memref<3x1024x128xbf16, #tpu.memory_space<vmem>>, vector<1x1024x128xbf16>
    %11 = vector.shape_cast %10 : vector<1x1024x128xbf16> to vector<1024x128xbf16>
    %cst_12 = arith.constant dense<0.000000e+00> : vector<8x128xf32>
    %12 = tpu.matmul %9, %11, %cst_12 {dimension_numbers = #tpu.dot_dimension_numbers<[1], [0], [0], [1], [0, 0, 1, 1], [], []>} : vector<8x1024xbf16>, vector<1024x128xbf16>, vector<8x128xf32> -> vector<8x128xf32>
    %13 = arith.addf %7, %12 : vector<8x128xf32>
    %c1_13 = arith.constant 1 : index
    %c0_14 = arith.constant 0 : index
    %c0_15 = arith.constant 0 : index
    %14 = vector.load %arg3[%c1_13, %c0_14, %c0_15] : memref<2x8x1024xbf16, #tpu.memory_space<vmem>>, vector<1x8x1024xbf16>
    %15 = vector.shape_cast %14 : vector<1x8x1024xbf16> to vector<8x1024xbf16>
    %c2 = arith.constant 2 : index
    %c0_16 = arith.constant 0 : index
    %c0_17 = arith.constant 0 : index
    %16 = vector.load %arg4[%c2, %c0_16, %c0_17] : memref<3x1024x128xbf16, #tpu.memory_space<vmem>>, vector<1x1024x128xbf16>
    %17 = vector.shape_cast %16 : vector<1x1024x128xbf16> to vector<1024x128xbf16>
    %cst_18 = arith.constant dense<0.000000e+00> : vector<8x128xf32>
    %18 = tpu.matmul %15, %17, %cst_18 {dimension_numbers = #tpu.dot_dimension_numbers<[1], [0], [0], [1], [0, 0, 1, 1], [], []>} : vector<8x1024xbf16>, vector<1024x128xbf16>, vector<8x128xf32> -> vector<8x128xf32>
    %19 = arith.addf %13, %18 : vector<8x128xf32>
    %20 = arith.addf %3, %19 : vector<8x128xf32>
    %c0_19 = arith.constant 0 : index
    %c0_20 = arith.constant 0 : index
    %21 = vector.load %arg8[%c0_19, %c0_20] : memref<8x128xf32, #tpu.memory_space<vmem>>, vector<8x128xf32>
    tpu.vector_store %arg8[%c0_19, %c0_20], %20 {strides = array<i32>} : memref<8x128xf32, #tpu.memory_space<vmem>>, vector<8x128xf32>,
    %c0_i32_21 = arith.constant 0 : i32
    %22 = arith.cmpi eq, %arg1, %c0_i32_21 : i32
    %23 = arith.extui %22 : i1 to i32
    %c0_i32_22 = arith.constant 0 : i32
    %24 = arith.cmpi ne, %23, %c0_i32_22 : i32
    scf.if %24 {
      %c0_23 = arith.constant 0 : index
      %c0_24 = arith.constant 0 : index
      %25 = vector.load %arg8[%c0_23, %c0_24] : memref<8x128xf32, #tpu.memory_space<vmem>>, vector<8x128xf32>
      %c0_25 = arith.constant 0 : index
      %c0_26 = arith.constant 0 : index
      %26 = vector.load %arg5[%c0_25, %c0_26] : memref<1x128xf32, #tpu.memory_space<vmem>>, vector<1x128xf32>
      %27 = vector.broadcast %26 : vector<1x128xf32> to vector<8x128xf32>
      %28 = arith.addf %25, %27 : vector<8x128xf32>
      %cst_27 = arith.constant 0.000000e+00 : f32
      %29 = vector.broadcast %cst_27 : f32 to vector<8x128xf32>
      %30 = arith.maximumf %28, %29 : vector<8x128xf32>
      %c0_28 = arith.constant 0 : index
      %c0_29 = arith.constant 0 : index
      %31 = vector.load %arg6[%c0_28, %c0_29] : memref<1x128xf32, #tpu.memory_space<vmem>>, vector<1x128xf32>
      %32 = vector.broadcast %31 : vector<1x128xf32> to vector<8x128xf32>
      %33 = arith.mulf %30, %32 : vector<8x128xf32>
      %34 = vector.shape_cast %33 : vector<8x128xf32> to vector<1x8x128xf32>
      %cst_30 = arith.constant dense<0.000000e+00> : vector<1xf32>
      %35 = vector.multi_reduction <add>, %34, %cst_30 [1, 2] : vector<1x8x128xf32> to vector<1xf32>
      %36 = vector.shape_cast %35 : vector<1xf32> to vector<1x1x1xf32>
      %37 = vector.extract %36[0, 0, 0] : f32 from vector<1x1x1xf32>
      %38 = vector.broadcast %37 : f32 to vector<1x8x128xf32>
      %c0_31 = arith.constant 0 : index
      %c0_32 = arith.constant 0 : index
      %c0_33 = arith.constant 0 : index
      %39 = vector.load %arg7[%c0_31, %c0_32, %c0_33] : memref<1x8x128xf32, #tpu.memory_space<vmem>>, vector<1x8x128xf32>
      tpu.vector_store %arg7[%c0_31, %c0_32, %c0_33], %38 {strides = array<i32>} : memref<1x8x128xf32, #tpu.memory_space<vmem>>, vector<1x8x128xf32>,
    } else {
    }
    return
  }
  func.func @transform_0(%arg0: i32, %arg1: i32) -> (i32, i32) {
    %c0_i32 = arith.constant 0 : i32
    %c0_i32_0 = arith.constant 0 : i32
    return %c0_i32, %arg1 : i32, i32
  }
  func.func @transform_1(%arg0: i32, %arg1: i32) -> (i32, i32, i32) {
    %c0_i32 = arith.constant 0 : i32
    %c0_i32_0 = arith.constant 0 : i32
    %c0_i32_1 = arith.constant 0 : i32
    return %c0_i32, %c0_i32_0, %arg1 : i32, i32, i32
  }
  func.func @transform_2(%arg0: i32, %arg1: i32) -> (i32, i32, i32) {
    %c0_i32 = arith.constant 0 : i32
    %c0_i32_0 = arith.constant 0 : i32
    return %c0_i32, %arg1, %arg0 : i32, i32, i32
  }
  func.func @transform_3(%arg0: i32, %arg1: i32) -> (i32, i32) {
    %c0_i32 = arith.constant 0 : i32
    %c0_i32_0 = arith.constant 0 : i32
    return %c0_i32, %arg0 : i32, i32
  }
  func.func @transform_4(%arg0: i32, %arg1: i32) -> (i32, i32) {
    %c0_i32 = arith.constant 0 : i32
    %c0_i32_0 = arith.constant 0 : i32
    return %c0_i32, %arg0 : i32, i32
  }
  func.func @transform_5(%arg0: i32, %arg1: i32) -> (i32, i32, i32) {
    %c0_i32 = arith.constant 0 : i32
    %c0_i32_0 = arith.constant 0 : i32
    %c0_i32_1 = arith.constant 0 : i32
    return %arg0, %c0_i32, %c0_i32_0 : i32, i32, i32
  }
}

</mosaic_0001>

<llo_original>
// kernel: tpu_custom_call.1
$region0: #{tpu_custom_call.1}
  #allocation0 [shape = 'u32[]', space=smem, size = 0x4, offset = 0x4, fixed_abs, tag = 'smem constant byte address 0x4 - core index']
  #allocation1 [shape = 'u32[144,128]{1,0:T(1,128)}', space=vmem, size = 0x12000, scoped, tag = 'internal scratch']
  #allocation2 [shape = 'f32[8,128]{1,0:T(8,128)}', space=vmem, size = 0x1000, scoped, tag = 'scratch operand']
  %s0 = inlined_call_operand.hbm [shape: bf16[8,1024], index: 0, kind: input, shape index: {}]
  %s1 = inlined_call_operand.hbm [shape: bf16[2,8,1024], index: 1, kind: input, shape index: {}]
  %s2 = inlined_call_operand.hbm [shape: bf16[3,1024,256], index: 2, kind: input, shape index: {}]
  %s3 = inlined_call_operand.hbm [shape: f32[1,256], index: 3, kind: input, shape index: {}]
  %s4 = inlined_call_operand.hbm [shape: f32[1,256], index: 4, kind: input, shape index: {}]
  %s5 = inlined_call_operand.hbm [shape: f32[2,8,128], index: 5, kind: output, shape index: {}]
  %s6 = sld [smem:[#allocation0]]
  $region81: #{tpu_custom_call.1} parent=0
    _
  %s8 = ssub.s32 1, %s6
  %s9 = scalar_select 0, %s8, %s6
  $region1: #{tpu_custom_call.1} parent=0
    #allocation3 [shape = 'u8[16384]{0}', space=vmem, size = 0x4000, scoped, tag = 'input window, operand 0, single buffered']
    #allocation4 [shape = 's32[2]{0}', space=sflag, size = 0x8, scoped, tag = 'scoped memory for tpu_custom_call.1']
    #allocation5 [shape = 's32[2]{0}', space=sflag, size = 0x8, scoped, tag = 'scoped memory for tpu_custom_call.1']
    #allocation6 [shape = 'u8[32768]{0}', space=vmem, size = 0x8000, scoped, tag = 'input window, operand 1, single buffered']
    #allocation7 [shape = 's32[1]{0}', space=sflag, size = 0x4, scoped, tag = 'scoped memory for tpu_custom_call.1']
    #allocation8 [shape = 'u8[1572864]{0}', space=vmem, size = 0x180000, scoped, tag = 'input window, operand 2']
    #allocation9 [shape = 'u8[1024]{0}', space=vmem, size = 0x400, scoped, tag = 'input window, operand 3']
    #allocation10 [shape = 'u8[1024]{0}', space=vmem, size = 0x400, scoped, tag = 'input window, operand 4']
    #allocation11 [shape = 'u8[8192]{0}', space=vmem, size = 0x2000, scoped, tag = 'output window, operand 0']
    %10 = vsyncpa [#allocation4], 0
    %11 = vsyncpa [#allocation7], 0
    %12 = vsyncpa [#allocation5], 0
    %s13 = scalar_lea.sflag [#allocation5], 1
    %14 = vsyncpa %s13, 0
    loop: start=0, step=1, limit=4
    $region2: #{tpu_custom_call.1} parent=1 // loop_pre_header
      _
    $region3: #{tpu_custom_call.1} parent=1 // loop_header
      %s16 = sphi 0, %s20
      %p17 = scmp.ge.s32.totalorder %s16, 4
      %s23 = sphi 0, %s35
      %s24 = sphi 0, %s31
      %s25 = sphi 0, %s23
      %s26 = sphi 0, %s24
      %s27 = sphi 0, %s25
      %s28 = sphi 0, %s26
      %s38 = sphi 0, %s40
      %s41 = sphi 0, %s38
      %s42 = sphi 0, %s41
      %s58 = sphi 0, %s42
      %s64 = sphi 0, %s66
      %s67 = sphi 0, %s64
      %s68 = sphi 0, %s67
      %s84 = sphi 0, %s68
      %s92 = sphi 0, %s94
      %s95 = sphi 0, %s92
      %s96 = sphi 0, %s95
      %s112 = sphi 0, %s96
      %s118 = sphi 0, %s120
      %s121 = sphi 0, %s118
      %s122 = sphi 0, %s121
      %s138 = sphi 0, %s122
      %s144 = sphi 0, %s146
      %s147 = sphi 0, %s144
      %s148 = sphi 0, %s147
      %s164 = sphi 0, %s148
      %s170 = sphi 0, %s172
      %s173 = sphi 0, %s170
      %s174 = sphi 0, %s173
      %s190 = sphi 0, %s174
    $region4: #{tpu_custom_call.1} parent=1 // loop_header_branch
      %19 = sbr.rel (%p17) target = $region8
    $region5: #{tpu_custom_call.1} parent=1 // loop_body
      %s21 = ssub.s32 %s16, 1
      %s22 = ssub.s32 %s16, 2
      %s29 = sadd.s32 1, %s24
      %p30 = scmp.ge.s32.totalorder %s29, 1
      %s31 = scalar_select %p30, 0, %s29
      %s32 = sadd.s32 1, %s23
      %s33 = scalar_select %p30, %s32, %s23
      %p34 = scmp.ge.s32.totalorder %s33, 2
      %s35 = scalar_select %p34, 0, %s33
      %s36 = ssub.s32 %s24, %s31
      %p37 = scmp.eq.s32.totalorder %s36, 0
      %s39 = sadd.s32 %s38, 1
      %s40 = scalar_select %p37, %s38, %s39
      %p43 = pneg %p37
      %p44 = scmp.eq.s32.totalorder %s16, 1
      %p45 = por %p43, %p44
      %p46 = scmp.ne.s32.totalorder %s38, %s41
      %p47 = scmp.eq.s32.totalorder %s16, 0
      %p48 = por %p46, %p47
      %p49 = scmp.ne.s32.totalorder %s38, %s41
      %p50 = scmp.eq.s32.totalorder %s21, 1
      %p51 = por %p49, %p50
      %p52 = scmp.ne.s32.totalorder %s41, %s42
      %p53 = scmp.eq.s32.totalorder %s21, 0
      %p54 = por %p52, %p53
      %p55 = scmp.ne.s32.totalorder %s41, %s42
      %p56 = scmp.eq.s32.totalorder %s22, 1
      %p57 = por %p55, %p56
      %p59 = scmp.ne.s32.totalorder %s42, %s58
      %p60 = scmp.eq.s32.totalorder %s22, 0
      %p61 = por %p59, %p60
      %s62 = ssub.s32 %s24, %s31
      %p63 = scmp.eq.s32.totalorder %s62, 0
      %s65 = sadd.s32 %s64, 1
      %s66 = scalar_select %p63, %s64, %s65
      %p69 = pneg %p63
      %p70 = scmp.eq.s32.totalorder %s16, 1
      %p71 = por %p69, %p70
      %p72 = scmp.ne.s32.totalorder %s64, %s67
      %p73 = scmp.eq.s32.totalorder %s16, 0
      %p74 = por %p72, %p73
      %p75 = scmp.ne.s32.totalorder %s64, %s67
      %p76 = scmp.eq.s32.totalorder %s21, 1
      %p77 = por %p75, %p76
      %p78 = scmp.ne.s32.totalorder %s67, %s68
      %p79 = scmp.eq.s32.totalorder %s21, 0
      %p80 = por %p78, %p79
      %p81 = scmp.ne.s32.totalorder %s67, %s68
      %p82 = scmp.eq.s32.totalorder %s22, 1
      %p83 = por %p81, %p82
      %p85 = scmp.ne.s32.totalorder %s68, %s84
      %p86 = scmp.eq.s32.totalorder %s22, 0
      %p87 = por %p85, %p86
      %s88 = ssub.s32 %s24, %s31
      %s89 = ssub.s32 %s23, %s35
      %s90 = sor.u32 %s88, %s89
      %p91 = scmp.eq.s32.totalorder %s90, 0
      %s93 = sadd.s32 %s92, 1
      %s94 = scalar_select %p91, %s92, %s93
      %p97 = pneg %p91
      %p98 = scmp.eq.s32.totalorder %s16, 1
      %p99 = por %p97, %p98
      %p100 = scmp.ne.s32.totalorder %s92, %s95
      %p101 = scmp.eq.s32.totalorder %s16, 0
      %p102 = por %p100, %p101
      %p103 = scmp.ne.s32.totalorder %s92, %s95
      %p104 = scmp.eq.s32.totalorder %s21, 1
      %p105 = por %p103, %p104
      %p106 = scmp.ne.s32.totalorder %s95, %s96
      %p107 = scmp.eq.s32.totalorder %s21, 0
      %p108 = por %p106, %p107
      %p109 = scmp.ne.s32.totalorder %s95, %s96
      %p110 = scmp.eq.s32.totalorder %s22, 1
      %p111 = por %p109, %p110
      %p113 = scmp.ne.s32.totalorder %s96, %s112
      %p114 = scmp.eq.s32.totalorder %s22, 0
      %p115 = por %p113, %p114
      %s116 = ssub.s32 %s23, %s35
      %p117 = scmp.eq.s32.totalorder %s116, 0
      %s119 = sadd.s32 %s118, 1
      %s120 = scalar_select %p117, %s118, %s119
      %p123 = pneg %p117
      %p124 = scmp.eq.s32.totalorder %s16, 1
      %p125 = por %p123, %p124
      %p126 = scmp.ne.s32.totalorder %s118, %s121
      %p127 = scmp.eq.s32.totalorder %s16, 0
      %p128 = por %p126, %p127
      %p129 = scmp.ne.s32.totalorder %s118, %s121
      %p130 = scmp.eq.s32.totalorder %s21, 1
      %p131 = por %p129, %p130
      %p132 = scmp.ne.s32.totalorder %s121, %s122
      %p133 = scmp.eq.s32.totalorder %s21, 0
      %p134 = por %p132, %p133
      %p135 = scmp.ne.s32.totalorder %s121, %s122
      %p136 = scmp.eq.s32.totalorder %s22, 1
      %p137 = por %p135, %p136
      %p139 = scmp.ne.s32.totalorder %s122, %s138
      %p140 = scmp.eq.s32.totalorder %s22, 0
      %p141 = por %p139, %p140
      %s142 = ssub.s32 %s23, %s35
      %p143 = scmp.eq.s32.totalorder %s142, 0
      %s145 = sadd.s32 %s144, 1
      %s146 = scalar_select %p143, %s144, %s145
      %p149 = pneg %p143
      %p150 = scmp.eq.s32.totalorder %s16, 1
      %p151 = por %p149, %p150
      %p152 = scmp.ne.s32.totalorder %s144, %s147
      %p153 = scmp.eq.s32.totalorder %s16, 0
      %p154 = por %p152, %p153
      %p155 = scmp.ne.s32.totalorder %s144, %s147
      %p156 = scmp.eq.s32.totalorder %s21, 1
      %p157 = por %p155, %p156
      %p158 = scmp.ne.s32.totalorder %s147, %s148
      %p159 = scmp.eq.s32.totalorder %s21, 0
      %p160 = por %p158, %p159
      %p161 = scmp.ne.s32.totalorder %s147, %s148
      %p162 = scmp.eq.s32.totalorder %s22, 1
      %p163 = por %p161, %p162
      %p165 = scmp.ne.s32.totalorder %s148, %s164
      %p166 = scmp.eq.s32.totalorder %s22, 0
      %p167 = por %p165, %p166
      %s168 = ssub.s32 %s23, %s35
      %p169 = scmp.eq.s32.totalorder %s168, 0
      %s171 = sadd.s32 %s170, 1
      %s172 = scalar_select %p169, %s170, %s171
      %p175 = pneg %p169
      %p176 = scmp.eq.s32.totalorder %s16, 1
      %p177 = por %p175, %p176
      %p178 = scmp.ne.s32.totalorder %s170, %s173
      %p179 = scmp.eq.s32.totalorder %s16, 0
      %p180 = por %p178, %p179
      %p181 = scmp.ne.s32.totalorder %s170, %s173
      %p182 = scmp.eq.s32.totalorder %s21, 1
      %p183 = por %p181, %p182
      %p184 = scmp.ne.s32.totalorder %s173, %s174
      %p185 = scmp.eq.s32.totalorder %s21, 0
      %p186 = por %p184, %p185
      %p187 = scmp.ne.s32.totalorder %s173, %s174
      %p188 = scmp.eq.s32.totalorder %s22, 1
      %p189 = por %p187, %p188
      %p191 = scmp.ne.s32.totalorder %s174, %s190
      %p192 = scmp.eq.s32.totalorder %s22, 0
      %p193 = por %p191, %p192
      %p194 = scmp.le.s32.totalorder 1, %s16
      %p195 = scmp.lt.s32.totalorder %s16, 3
      %p196 = pnand %p194, %p195
      %p197 = pneg %p196
      // Predicated region
      $region9: #{tpu_custom_call.1} parent=5 // pred_check
        _
      $region10: #{tpu_custom_call.1} parent=5 // pred_check_branch
        %199 = sbr.rel (%p196) target = $region12
      $region11: #{tpu_custom_call.1} parent=5 // pred_region
        %s200 = ssub.s32 %s16, 1
        // Predicated region
        $region13: #{tpu_custom_call.1} parent=11 // pred_check
          %p201 = pneg %p54
        $region14: #{tpu_custom_call.1} parent=11 // pred_check_branch
          %203 = sbr.rel (%p201) target = $region16
        $region15: #{tpu_custom_call.1} parent=11 // pred_region
          %s204 = smul.u32 8, %s26
          %s206 = ssub.s32 512, 512
          %207 = vsyncadd [#allocation4], %s206
          %s208 = smul.addr %s204, 64
          %s209 = scalar_lea.hbm %s0, %s208
          %s211 = sshll.u32 [#allocation3], 4
          %s212 = int_to_ptr.vmem [resolvable:$true] %s211
          %214 = dma.hbm_to_vmem [thread:$0]  %s209, 512, %s212, [#allocation4]
        $region16: #{tpu_custom_call.1} parent=11 // pred_fallthru
          _
        // Predicated region
        $region17: #{tpu_custom_call.1} parent=11 // pred_check
          %p215 = pneg %p80
        $region18: #{tpu_custom_call.1} parent=11 // pred_check_branch
          %217 = sbr.rel (%p215) target = $region20
        $region19: #{tpu_custom_call.1} parent=11 // pred_region
          %s218 = smul.u32 8, %s26
          %s220 = ssub.s32 1024, 1024
          %221 = vsyncadd [#allocation7], %s220
          %s222 = smul.addr %s218, 64
          %s223 = scalar_lea.hbm %s1, %s222
          %s224 = sshll.u32 [#allocation6], 4
          %s225 = int_to_ptr.vmem [resolvable:$true] %s224
          %230 = dma.hbm_to_vmem [thread:$0]  %s223, 1024, %s225, [#allocation7], 512, 512, 32
        $region20: #{tpu_custom_call.1} parent=11 // pred_fallthru
          _
      $region12: #{tpu_custom_call.1} parent=5 // pred_fallthru
        _
      %p231 = scmp.lt.s32.totalorder %s16, 2
      // Predicated region
      $region21: #{tpu_custom_call.1} parent=5 // pred_check
        %p232 = pneg %p231
      $region22: #{tpu_custom_call.1} parent=5 // pred_check_branch
        %234 = sbr.rel (%p232) target = $region24
      $region23: #{tpu_custom_call.1} parent=5 // pred_region
        // Predicated region
        $region25: #{tpu_custom_call.1} parent=23 // pred_check
          %p235 = pneg %p102
        $region26: #{tpu_custom_call.1} parent=23 // pred_check_branch
          %237 = sbr.rel (%p235) target = $region28
        $region27: #{tpu_custom_call.1} parent=23 // pred_region
          %s238 = sand.u32 %s16, 1
          %s239 = scalar_lea.sflag [#allocation4], %s238
          %s240 = sand.u32 %s92, 1
          %s241 = smul.addr %s240, 1536
          %s242 = scalar_lea.vmem [#allocation8], %s241
          %s243 = smul.u32 128, %s24
          %s245 = ssub.s32 24576, 24576
          %246 = vsyncadd %s239, %s245
          %s247 = smul.addr %s243, 2
          %s248 = sadd.s32 %s23, %s247
          %s249 = smul.addr %s248, 64
          %s250 = scalar_lea.hbm %s2, %s249
          %s251 = sshll.u32 %s242, 4
          %s252 = int_to_ptr.vmem [resolvable:$true] %s251
          %257 = dma.hbm_to_vmem [thread:$0]  %s250, 24576, %s252, %s239, 128, 64, 4
        $region28: #{tpu_custom_call.1} parent=23 // pred_fallthru
          _
        // Predicated region
        $region29: #{tpu_custom_call.1} parent=23 // pred_check
          %p258 = pneg %p128
        $region30: #{tpu_custom_call.1} parent=23 // pred_check_branch
          %260 = sbr.rel (%p258) target = $region32
        $region31: #{tpu_custom_call.1} parent=23 // pred_region
          %s261 = sand.u32 %s16, 1
          %s262 = scalar_lea.sflag [#allocation4], %s261
          %s263 = sand.u32 %s118, 1
          %s264 = scalar_lea.vmem [#allocation9], %s263
          %s266 = ssub.s32 16, 16
          %267 = vsyncadd %s262, %s266
          %s268 = smul.addr %s23, 16
          %s269 = scalar_lea.hbm %s3, %s268
          %s271 = sshll.u32 %s264, 4
          %s272 = int_to_ptr.vmem [resolvable:$true] %s271
          %274 = dma.hbm_to_vmem [thread:$0]  %s269, 16, %s272, %s262
        $region32: #{tpu_custom_call.1} parent=23 // pred_fallthru
          _
        // Predicated region
        $region33: #{tpu_custom_call.1} parent=23 // pred_check
          %p275 = pneg %p154
        $region34: #{tpu_custom_call.1} parent=23 // pred_check_branch
          %277 = sbr.rel (%p275) target = $region36
        $region35: #{tpu_custom_call.1} parent=23 // pred_region
          %s278 = sand.u32 %s16, 1
          %s279 = scalar_lea.sflag [#allocation4], %s278
          %s280 = sand.u32 %s144, 1
          %s281 = scalar_lea.vmem [#allocation10], %s280
          %s283 = ssub.s32 16, 16
          %284 = vsyncadd %s279, %s283
          %s285 = smul.addr %s23, 16
          %s286 = scalar_lea.hbm %s4, %s285
          %s288 = sshll.u32 %s281, 4
          %s289 = int_to_ptr.vmem [resolvable:$true] %s288
          %291 = dma.hbm_to_vmem [thread:$0]  %s286, 16, %s289, %s279
        $region36: #{tpu_custom_call.1} parent=23 // pred_fallthru
          _
      $region24: #{tpu_custom_call.1} parent=5 // pred_fallthru
        _
      %p292 = scmp.le.s32.totalorder 1, %s16
      %p293 = scmp.lt.s32.totalorder %s16, 3
      %p294 = pnand %p292, %p293
      %p295 = pneg %p294
      // Predicated region
      $region37: #{tpu_custom_call.1} parent=5 // pred_check
        _
      $region38: #{tpu_custom_call.1} parent=5 // pred_check_branch
        %297 = sbr.rel (%p294) target = $region40
      $region39: #{tpu_custom_call.1} parent=5 // pred_region
        %s298 = ssub.s32 %s16, 1
        // Predicated region
        $region41: #{tpu_custom_call.1} parent=39 // pred_check
          %p299 = pneg %p54
        $region42: #{tpu_custom_call.1} parent=39 // pred_check_branch
          %301 = sbr.rel (%p299) target = $region44
        $region43: #{tpu_custom_call.1} parent=39 // pred_region
          %302 = dma.done [#allocation4], 512
        $region44: #{tpu_custom_call.1} parent=39 // pred_fallthru
          _
        // Predicated region
        $region45: #{tpu_custom_call.1} parent=39 // pred_check
          %p303 = pneg %p80
        $region46: #{tpu_custom_call.1} parent=39 // pred_check_branch
          %305 = sbr.rel (%p303) target = $region48
        $region47: #{tpu_custom_call.1} parent=39 // pred_region
          %306 = dma.done [#allocation7], 1024
        $region48: #{tpu_custom_call.1} parent=39 // pred_fallthru
          _
        %s307 = sand.u32 %s21, 1
        %s308 = scalar_lea.sflag [#allocation4], %s307
        %s309 = sand.u32 %s95, 1
        %s310 = smul.addr %s309, 1536
        %s311 = scalar_lea.vmem [#allocation8], %s310
        // Predicated region
        $region49: #{tpu_custom_call.1} parent=39 // pred_check
          %p312 = pneg %p108
        $region50: #{tpu_custom_call.1} parent=39 // pred_check_branch
          %314 = sbr.rel (%p312) target = $region52
        $region51: #{tpu_custom_call.1} parent=39 // pred_region
          %315 = dma.done %s308, 24576
        $region52: #{tpu_custom_call.1} parent=39 // pred_fallthru
          _
        %s316 = sand.u32 %s21, 1
        %s317 = scalar_lea.sflag [#allocation4], %s316
        %s318 = sand.u32 %s121, 1
        %s319 = scalar_lea.vmem [#allocation9], %s318
        // Predicated region
        $region53: #{tpu_custom_call.1} parent=39 // pred_check
          %p320 = pneg %p134
        $region54: #{tpu_custom_call.1} parent=39 // pred_check_branch
          %322 = sbr.rel (%p320) target = $region56
        $region55: #{tpu_custom_call.1} parent=39 // pred_region
          %323 = dma.done %s317, 16
        $region56: #{tpu_custom_call.1} parent=39 // pred_fallthru
          _
        %s324 = sand.u32 %s21, 1
        %s325 = scalar_lea.sflag [#allocation4], %s324
        %s326 = sand.u32 %s147, 1
        %s327 = scalar_lea.vmem [#allocation10], %s326
        // Predicated region
        $region57: #{tpu_custom_call.1} parent=39 // pred_check
          %p328 = pneg %p160
        $region58: #{tpu_custom_call.1} parent=39 // pred_check_branch
          %330 = sbr.rel (%p328) target = $region60
        $region59: #{tpu_custom_call.1} parent=39 // pred_region
          %331 = dma.done %s325, 16
        $region60: #{tpu_custom_call.1} parent=39 // pred_fallthru
          _
        %p332 = pneg %p54
        %p333 = pneg %p51
        %p334 = pneg %p80
        %p335 = pneg %p77
        %s336 = sand.u32 %s21, 1
        %s337 = scalar_lea.sflag [#allocation4], %s336
        %s338 = sand.u32 %s95, 1
        %s339 = smul.addr %s338, 1536
        %s340 = scalar_lea.vmem [#allocation8], %s339
        %p341 = pneg %p108
        %p342 = pneg %p105
        %s343 = sand.u32 %s21, 1
        %s344 = scalar_lea.sflag [#allocation4], %s343
        %s345 = sand.u32 %s121, 1
        %s346 = scalar_lea.vmem [#allocation9], %s345
        %p347 = pneg %p134
        %p348 = pneg %p131
        %s349 = sand.u32 %s21, 1
        %s350 = scalar_lea.sflag [#allocation4], %s349
        %s351 = sand.u32 %s147, 1
        %s352 = scalar_lea.vmem [#allocation10], %s351
        %p353 = pneg %p160
        %p354 = pneg %p157
        %p355 = pneg %p186
        %p356 = pneg %p183
        %s357 = sand.u32 %s173, 1
        %s358 = scalar_lea.sflag [#allocation5], %s357
        %s359 = sand.u32 %s173, 1
        %s360 = smul.addr %s359, 8
        %s361 = scalar_lea.vmem [#allocation11], %s360
        %s362 = smul.u32 8, %s26
        %s363 = smul.u32 8, %s26
        %s364 = smul.u32 128, %s26
        %p366 = scmp.eq.s32.totalorder %s26, 0
        // Predicated region
        $region61: #{tpu_custom_call.1} parent=39 // pred_check
          %p367 = pneg %p366
        $region62: #{tpu_custom_call.1} parent=39 // pred_check_branch
          %369 = sbr.rel (%p367) target = $region64
        $region63: #{tpu_custom_call.1} parent=39 // pred_region
          %370 = vst [vmem:[#allocation2] sm:$0xff] 0.0
        $region64: #{tpu_custom_call.1} parent=39 // pred_fallthru
          _
        %v371 = vld [vmem:[#allocation2] sm:$0xff]
        %v372 = vld [vmem:[#allocation3] sm:$0xff]
        %v373 = vld [vmem:[#allocation3 + $0x8] sm:$0xff]
        %v374 = vld [vmem:[#allocation3 + $0x10] sm:$0xff]
        %v375 = vld [vmem:[#allocation3 + $0x18] sm:$0xff]
        %v376 = vld [vmem:[%s311] sm:$0xf]
        %v377 = vld [vmem:[%s311 + $0x4] sm:$0xf]
        %v378 = vld [vmem:[%s311 + $0x8] sm:$0xf]
        %v379 = vld [vmem:[%s311 + $0xc] sm:$0xf]
        %v380 = vld [vmem:[%s311 + $0x10] sm:$0xf]
        %v381 = vld [vmem:[%s311 + $0x14] sm:$0xf]
        %v382 = vld [vmem:[%s311 + $0x18] sm:$0xf]
        %v383 = vld [vmem:[%s311 + $0x1c] sm:$0xf]
        %v384 = vld [vmem:[%s311 + $0x20] sm:$0xf]
        %v385 = vld [vmem:[%s311 + $0x24] sm:$0xf]
        %v386 = vld [vmem:[%s311 + $0x28] sm:$0xf]
        %v387 = vld [vmem:[%s311 + $0x2c] sm:$0xf]
        %v388 = vld [vmem:[%s311 + $0x30] sm:$0xf]
        %v389 = vld [vmem:[%s311 + $0x34] sm:$0xf]
        %v390 = vld [vmem:[%s311 + $0x38] sm:$0xf]
        %v391 = vld [vmem:[%s311 + $0x3c] sm:$0xf]
        %v392 = vld [vmem:[%s311 + $0x40] sm:$0xf]
        %v393 = vld [vmem:[%s311 + $0x44] sm:$0xf]
        %v394 = vld [vmem:[%s311 + $0x48] sm:$0xf]
        %v395 = vld [vmem:[%s311 + $0x4c] sm:$0xf]
        %v396 = vld [vmem:[%s311 + $0x50] sm:$0xf]
        %v397 = vld [vmem:[%s311 + $0x54] sm:$0xf]
        %v398 = vld [vmem:[%s311 + $0x58] sm:$0xf]
        %v399 = vld [vmem:[%s311 + $0x5c] sm:$0xf]
        %v400 = vld [vmem:[%s311 + $0x60] sm:$0xf]
        %v401 = vld [vmem:[%s311 + $0x64] sm:$0xf]
        %v402 = vld [vmem:[%s311 + $0x68] sm:$0xf]
        %v403 = vld [vmem:[%s311 + $0x6c] sm:$0xf]
        %v404 = vld [vmem:[%s311 + $0x70] sm:$0xf]
        %v405 = vld [vmem:[%s311 + $0x74] sm:$0xf]
        %v406 = vld [vmem:[%s311 + $0x78] sm:$0xf]
        %v407 = vld [vmem:[%s311 + $0x7c] sm:$0xf]
        %v408 = vld [vmem:[%s311 + $0x80] sm:$0xf]
        %v409 = vld [vmem:[%s311 + $0x84] sm:$0xf]
        %v410 = vld [vmem:[%s311 + $0x88] sm:$0xf]
        %v411 = vld [vmem:[%s311 + $0x8c] sm:$0xf]
        %v412 = vld [vmem:[%s311 + $0x90] sm:$0xf]
        %v413 = vld [vmem:[%s311 + $0x94] sm:$0xf]
        %v414 = vld [vmem:[%s311 + $0x98] sm:$0xf]
        %v415 = vld [vmem:[%s311 + $0x9c] sm:$0xf]
        %v416 = vld [vmem:[%s311 + $0xa0] sm:$0xf]
        %v417 = vld [vmem:[%s311 + $0xa4] sm:$0xf]
        %v418 = vld [vmem:[%s311 + $0xa8] sm:$0xf]
        %v419 = vld [vmem:[%s311 + $0xac] sm:$0xf]
        %v420 = vld [vmem:[%s311 + $0xb0] sm:$0xf]
        %v421 = vld [vmem:[%s311 + $0xb4] sm:$0xf]
        %v422 = vld [vmem:[%s311 + $0xb8] sm:$0xf]
        %v423 = vld [vmem:[%s311 + $0xbc] sm:$0xf]
        %v424 = vld [vmem:[%s311 + $0xc0] sm:$0xf]
        %v425 = vld [vmem:[%s311 + $0xc4] sm:$0xf]
        %v426 = vld [vmem:[%s311 + $0xc8] sm:$0xf]
        %v427 = vld [vmem:[%s311 + $0xcc] sm:$0xf]
        %v428 = vld [vmem:[%s311 + $0xd0] sm:$0xf]
        %v429 = vld [vmem:[%s311 + $0xd4] sm:$0xf]
        %v430 = vld [vmem:[%s311 + $0xd8] sm:$0xf]
        %v431 = vld [vmem:[%s311 + $0xdc] sm:$0xf]
        %v432 = vld [vmem:[%s311 + $0xe0] sm:$0xf]
        %v433 = vld [vmem:[%s311 + $0xe4] sm:$0xf]
        %v434 = vld [vmem:[%s311 + $0xe8] sm:$0xf]
        %v435 = vld [vmem:[%s311 + $0xec] sm:$0xf]
        %v436 = vld [vmem:[%s311 + $0xf0] sm:$0xf]
        %v437 = vld [vmem:[%s311 + $0xf4] sm:$0xf]
        %v438 = vld [vmem:[%s311 + $0xf8] sm:$0xf]
        %v439 = vld [vmem:[%s311 + $0xfc] sm:$0xf]
        %v440 = vld [vmem:[%s311 + $0x100] sm:$0xf]
        %v441 = vld [vmem:[%s311 + $0x104] sm:$0xf]
        %v442 = vld [vmem:[%s311 + $0x108] sm:$0xf]
        %v443 = vld [vmem:[%s311 + $0x10c] sm:$0xf]
        %v444 = vld [vmem:[%s311 + $0x110] sm:$0xf]
        %v445 = vld [vmem:[%s311 + $0x114] sm:$0xf]
        %v446 = vld [vmem:[%s311 + $0x118] sm:$0xf]
        %v447 = vld [vmem:[%s311 + $0x11c] sm:$0xf]
        %v448 = vld [vmem:[%s311 + $0x120] sm:$0xf]
        %v449 = vld [vmem:[%s311 + $0x124] sm:$0xf]
        %v450 = vld [vmem:[%s311 + $0x128] sm:$0xf]
        %v451 = vld [vmem:[%s311 + $0x12c] sm:$0xf]
        %v452 = vld [vmem:[%s311 + $0x130] sm:$0xf]
        %v453 = vld [vmem:[%s311 + $0x134] sm:$0xf]
        %v454 = vld [vmem:[%s311 + $0x138] sm:$0xf]
        %v455 = vld [vmem:[%s311 + $0x13c] sm:$0xf]
        %v456 = vld [vmem:[%s311 + $0x140] sm:$0xf]
        %v457 = vld [vmem:[%s311 + $0x144] sm:$0xf]
        %v458 = vld [vmem:[%s311 + $0x148] sm:$0xf]
        %v459 = vld [vmem:[%s311 + $0x14c] sm:$0xf]
        %v460 = vld [vmem:[%s311 + $0x150] sm:$0xf]
        %v461 = vld [vmem:[%s311 + $0x154] sm:$0xf]
        %v462 = vld [vmem:[%s311 + $0x158] sm:$0xf]
        %v463 = vld [vmem:[%s311 + $0x15c] sm:$0xf]
        %v464 = vld [vmem:[%s311 + $0x160] sm:$0xf]
        %v465 = vld [vmem:[%s311 + $0x164] sm:$0xf]
        %v466 = vld [vmem:[%s311 + $0x168] sm:$0xf]
        %v467 = vld [vmem:[%s311 + $0x16c] sm:$0xf]
        %v468 = vld [vmem:[%s311 + $0x170] sm:$0xf]
        %v469 = vld [vmem:[%s311 + $0x174] sm:$0xf]
        %v470 = vld [vmem:[%s311 + $0x178] sm:$0xf]
        %v471 = vld [vmem:[%s311 + $0x17c] sm:$0xf]
        %v472 = vld [vmem:[%s311 + $0x180] sm:$0xf]
        %v473 = vld [vmem:[%s311 + $0x184] sm:$0xf]
        %v474 = vld [vmem:[%s311 + $0x188] sm:$0xf]
        %v475 = vld [vmem:[%s311 + $0x18c] sm:$0xf]
        %v476 = vld [vmem:[%s311 + $0x190] sm:$0xf]
        %v477 = vld [vmem:[%s311 + $0x194] sm:$0xf]
        %v478 = vld [vmem:[%s311 + $0x198] sm:$0xf]
        %v479 = vld [vmem:[%s311 + $0x19c] sm:$0xf]
        %v480 = vld [vmem:[%s311 + $0x1a0] sm:$0xf]
        %v481 = vld [vmem:[%s311 + $0x1a4] sm:$0xf]
        %v482 = vld [vmem:[%s311 + $0x1a8] sm:$0xf]
        %v483 = vld [vmem:[%s311 + $0x1ac] sm:$0xf]
        %v484 = vld [vmem:[%s311 + $0x1b0] sm:$0xf]
        %v485 = vld [vmem:[%s311 + $0x1b4] sm:$0xf]
        %v486 = vld [vmem:[%s311 + $0x1b8] sm:$0xf]
        %v487 = vld [vmem:[%s311 + $0x1bc] sm:$0xf]
        %v488 = vld [vmem:[%s311 + $0x1c0] sm:$0xf]
        %v489 = vld [vmem:[%s311 + $0x1c4] sm:$0xf]
        %v490 = vld [vmem:[%s311 + $0x1c8] sm:$0xf]
        %v491 = vld [vmem:[%s311 + $0x1cc] sm:$0xf]
        %v492 = vld [vmem:[%s311 + $0x1d0] sm:$0xf]
        %v493 = vld [vmem:[%s311 + $0x1d4] sm:$0xf]
        %v494 = vld [vmem:[%s311 + $0x1d8] sm:$0xf]
        %v495 = vld [vmem:[%s311 + $0x1dc] sm:$0xf]
        %v496 = vld [vmem:[%s311 + $0x1e0] sm:$0xf]
        %v497 = vld [vmem:[%s311 + $0x1e4] sm:$0xf]
        %v498 = vld [vmem:[%s311 + $0x1e8] sm:$0xf]
        %v499 = vld [vmem:[%s311 + $0x1ec] sm:$0xf]
        %v500 = vld [vmem:[%s311 + $0x1f0] sm:$0xf]
        %v501 = vld [vmem:[%s311 + $0x1f4] sm:$0xf]
        %v502 = vld [vmem:[%s311 + $0x1f8] sm:$0xf]
        %v503 = vld [vmem:[%s311 + $0x1fc] sm:$0xf]
        %v504 = vld [vmem:[#allocation6] sm:$0xff]
        %v505 = vld [vmem:[#allocation6 + $0x8] sm:$0xff]
        %v506 = vld [vmem:[#allocation6 + $0x10] sm:$0xff]
        %v507 = vld [vmem:[#allocation6 + $0x18] sm:$0xff]
        %s508 = scalar_lea.vmem %s311, 512 [#allocation8]
        %v509 = vld [vmem:[%s508] sm:$0xf]
        %v510 = vld [vmem:[%s508 + $0x4] sm:$0xf]
        %v511 = vld [vmem:[%s508 + $0x8] sm:$0xf]
        %v512 = vld [vmem:[%s508 + $0xc] sm:$0xf]
        %v513 = vld [vmem:[%s508 + $0x10] sm:$0xf]
        %v514 = vld [vmem:[%s508 + $0x14] sm:$0xf]
        %v515 = vld [vmem:[%s508 + $0x18] sm:$0xf]
        %v516 = vld [vmem:[%s508 + $0x1c] sm:$0xf]
        %v517 = vld [vmem:[%s508 + $0x20] sm:$0xf]
        %v518 = vld [vmem:[%s508 + $0x24] sm:$0xf]
        %v519 = vld [vmem:[%s508 + $0x28] sm:$0xf]
        %v520 = vld [vmem:[%s508 + $0x2c] sm:$0xf]
        %v521 = vld [vmem:[%s508 + $0x30] sm:$0xf]
        %v522 = vld [vmem:[%s508 + $0x34] sm:$0xf]
        %v523 = vld [vmem:[%s508 + $0x38] sm:$0xf]
        %v524 = vld [vmem:[%s508 + $0x3c] sm:$0xf]
        %v525 = vld [vmem:[%s508 + $0x40] sm:$0xf]
        %v526 = vld [vmem:[%s508 + $0x44] sm:$0xf]
        %v527 = vld [vmem:[%s508 + $0x48] sm:$0xf]
        %v528 = vld [vmem:[%s508 + $0x4c] sm:$0xf]
        %v529 = vld [vmem:[%s508 + $0x50] sm:$0xf]
        %v530 = vld [vmem:[%s508 + $0x54] sm:$0xf]
        %v531 = vld [vmem:[%s508 + $0x58] sm:$0xf]
        %v532 = vld [vmem:[%s508 + $0x5c] sm:$0xf]
        %v533 = vld [vmem:[%s508 + $0x60] sm:$0xf]
        %v534 = vld [vmem:[%s508 + $0x64] sm:$0xf]
        %v535 = vld [vmem:[%s508 + $0x68] sm:$0xf]
        %v536 = vld [vmem:[%s508 + $0x6c] sm:$0xf]
        %v537 = vld [vmem:[%s508 + $0x70] sm:$0xf]
        %v538 = vld [vmem:[%s508 + $0x74] sm:$0xf]
        %v539 = vld [vmem:[%s508 + $0x78] sm:$0xf]
        %v540 = vld [vmem:[%s508 + $0x7c] sm:$0xf]
        %v541 = vld [vmem:[%s508 + $0x80] sm:$0xf]
        %v542 = vld [vmem:[%s508 + $0x84] sm:$0xf]
        %v543 = vld [vmem:[%s508 + $0x88] sm:$0xf]
        %v544 = vld [vmem:[%s508 + $0x8c] sm:$0xf]
        %v545 = vld [vmem:[%s508 + $0x90] sm:$0xf]
        %v546 = vld [vmem:[%s508 + $0x94] sm:$0xf]
        %v547 = vld [vmem:[%s508 + $0x98] sm:$0xf]
        %v548 = vld [vmem:[%s508 + $0x9c] sm:$0xf]
        %v549 = vld [vmem:[%s508 + $0xa0] sm:$0xf]
        %v550 = vld [vmem:[%s508 + $0xa4] sm:$0xf]
        %v551 = vld [vmem:[%s508 + $0xa8] sm:$0xf]
        %v552 = vld [vmem:[%s508 + $0xac] sm:$0xf]
        %v553 = vld [vmem:[%s508 + $0xb0] sm:$0xf]
        %v554 = vld [vmem:[%s508 + $0xb4] sm:$0xf]
        %v555 = vld [vmem:[%s508 + $0xb8] sm:$0xf]
        %v556 = vld [vmem:[%s508 + $0xbc] sm:$0xf]
        %v557 = vld [vmem:[%s508 + $0xc0] sm:$0xf]
        %v558 = vld [vmem:[%s508 + $0xc4] sm:$0xf]
        %v559 = vld [vmem:[%s508 + $0xc8] sm:$0xf]
        %v560 = vld [vmem:[%s508 + $0xcc] sm:$0xf]
        %v561 = vld [vmem:[%s508 + $0xd0] sm:$0xf]
        %v562 = vld [vmem:[%s508 + $0xd4] sm:$0xf]
        %v563 = vld [vmem:[%s508 + $0xd8] sm:$0xf]
        %v564 = vld [vmem:[%s508 + $0xdc] sm:$0xf]
        %v565 = vld [vmem:[%s508 + $0xe0] sm:$0xf]
        %v566 = vld [vmem:[%s508 + $0xe4] sm:$0xf]
        %v567 = vld [vmem:[%s508 + $0xe8] sm:$0xf]
        %v568 = vld [vmem:[%s508 + $0xec] sm:$0xf]
        %v569 = vld [vmem:[%s508 + $0xf0] sm:$0xf]
        %v570 = vld [vmem:[%s508 + $0xf4] sm:$0xf]
        %v571 = vld [vmem:[%s508 + $0xf8] sm:$0xf]
        %v572 = vld [vmem:[%s508 + $0xfc] sm:$0xf]
        %v573 = vld [vmem:[%s508 + $0x100] sm:$0xf]
        %v574 = vld [vmem:[%s508 + $0x104] sm:$0xf]
        %v575 = vld [vmem:[%s508 + $0x108] sm:$0xf]
        %v576 = vld [vmem:[%s508 + $0x10c] sm:$0xf]
        %v577 = vld [vmem:[%s508 + $0x110] sm:$0xf]
        %v578 = vld [vmem:[%s508 + $0x114] sm:$0xf]
        %v579 = vld [vmem:[%s508 + $0x118] sm:$0xf]
        %v580 = vld [vmem:[%s508 + $0x11c] sm:$0xf]
        %v581 = vld [vmem:[%s508 + $0x120] sm:$0xf]
        %v582 = vld [vmem:[%s508 + $0x124] sm:$0xf]
        %v583 = vld [vmem:[%s508 + $0x128] sm:$0xf]
        %v584 = vld [vmem:[%s508 + $0x12c] sm:$0xf]
        %v585 = vld [vmem:[%s508 + $0x130] sm:$0xf]
        %v586 = vld [vmem:[%s508 + $0x134] sm:$0xf]
        %v587 = vld [vmem:[%s508 + $0x138] sm:$0xf]
        %v588 = vld [vmem:[%s508 + $0x13c] sm:$0xf]
        %v589 = vld [vmem:[%s508 + $0x140] sm:$0xf]
        %v590 = vld [vmem:[%s508 + $0x144] sm:$0xf]
        %v591 = vld [vmem:[%s508 + $0x148] sm:$0xf]
        %v592 = vld [vmem:[%s508 + $0x14c] sm:$0xf]
        %v593 = vld [vmem:[%s508 + $0x150] sm:$0xf]
        %v594 = vld [vmem:[%s508 + $0x154] sm:$0xf]
        %v595 = vld [vmem:[%s508 + $0x158] sm:$0xf]
        %v596 = vld [vmem:[%s508 + $0x15c] sm:$0xf]
        %v597 = vld [vmem:[%s508 + $0x160] sm:$0xf]
        %v598 = vld [vmem:[%s508 + $0x164] sm:$0xf]
        %v599 = vld [vmem:[%s508 + $0x168] sm:$0xf]
        %v600 = vld [vmem:[%s508 + $0x16c] sm:$0xf]
        %v601 = vld [vmem:[%s508 + $0x170] sm:$0xf]
        %v602 = vld [vmem:[%s508 + $0x174] sm:$0xf]
        %v603 = vld [vmem:[%s508 + $0x178] sm:$0xf]
        %v604 = vld [vmem:[%s508 + $0x17c] sm:$0xf]
        %v605 = vld [vmem:[%s508 + $0x180] sm:$0xf]
        %v606 = vld [vmem:[%s508 + $0x184] sm:$0xf]
        %v607 = vld [vmem:[%s508 + $0x188] sm:$0xf]
        %v608 = vld [vmem:[%s508 + $0x18c] sm:$0xf]
        %v609 = vld [vmem:[%s508 + $0x190] sm:$0xf]
        %v610 = vld [vmem:[%s508 + $0x194] sm:$0xf]
        %v611 = vld [vmem:[%s508 + $0x198] sm:$0xf]
        %v612 = vld [vmem:[%s508 + $0x19c] sm:$0xf]
        %v613 = vld [vmem:[%s508 + $0x1a0] sm:$0xf]
        %v614 = vld [vmem:[%s508 + $0x1a4] sm:$0xf]
        %v615 = vld [vmem:[%s508 + $0x1a8] sm:$0xf]
        %v616 = vld [vmem:[%s508 + $0x1ac] sm:$0xf]
        %v617 = vld [vmem:[%s508 + $0x1b0] sm:$0xf]
        %v618 = vld [vmem:[%s508 + $0x1b4] sm:$0xf]
        %v619 = vld [vmem:[%s508 + $0x1b8] sm:$0xf]
        %v620 = vld [vmem:[%s508 + $0x1bc] sm:$0xf]
        %v621 = vld [vmem:[%s508 + $0x1c0] sm:$0xf]
        %v622 = vld [vmem:[%s508 + $0x1c4] sm:$0xf]
        %v623 = vld [vmem:[%s508 + $0x1c8] sm:$0xf]
        %v624 = vld [vmem:[%s508 + $0x1cc] sm:$0xf]
        %v625 = vld [vmem:[%s508 + $0x1d0] sm:$0xf]
        %v626 = vld [vmem:[%s508 + $0x1d4] sm:$0xf]
        %v627 = vld [vmem:[%s508 + $0x1d8] sm:$0xf]
        %v628 = vld [vmem:[%s508 + $0x1dc] sm:$0xf]
        %v629 = vld [vmem:[%s508 + $0x1e0] sm:$0xf]
        %v630 = vld [vmem:[%s508 + $0x1e4] sm:$0xf]
        %v631 = vld [vmem:[%s508 + $0x1e8] sm:$0xf]
        %v632 = vld [vmem:[%s508 + $0x1ec] sm:$0xf]
        %v633 = vld [vmem:[%s508 + $0x1f0] sm:$0xf]
        %v634 = vld [vmem:[%s508 + $0x1f4] sm:$0xf]
        %v635 = vld [vmem:[%s508 + $0x1f8] sm:$0xf]
        %v636 = vld [vmem:[%s508 + $0x1fc] sm:$0xf]
        %v641 = vunpack.c.l.b16 %v504
        %v642 = vunpack.c.h.b16 %v504
        %v643 = vunpack.c.l.b16 %v505
        %v644 = vunpack.c.h.b16 %v505
        %v645 = vunpack.c.l.b16 %v506
        %v646 = vunpack.c.h.b16 %v506
        %v647 = vunpack.c.l.b16 %v507
        %v648 = vunpack.c.h.b16 %v507
        %v649 = vpack.c.b16 %v641, %v641
        %v650 = vpack.c.b16 %v642, %v642
        %v651 = vpack.c.b16 %v643, %v643
        %v652 = vpack.c.b16 %v644, %v644
        %v653 = vpack.c.b16 %v645, %v645
        %v654 = vpack.c.b16 %v646, %v646
        %v655 = vpack.c.b16 %v647, %v647
        %v656 = vpack.c.b16 %v648, %v648
        %v793 = vunpack.c.l.b16 %v509
        %v794 = vunpack.c.l.b16 %v510
        %v795 = vunpack.c.l.b16 %v511
        %v796 = vunpack.c.l.b16 %v512
        %v797 = vunpack.c.l.b16 %v513
        %v798 = vunpack.c.l.b16 %v514
        %v799 = vunpack.c.l.b16 %v515
        %v800 = vunpack.c.l.b16 %v516
        %v801 = vunpack.c.l.b16 %v517
        %v802 = vunpack.c.l.b16 %v518
        %v803 = vunpack.c.l.b16 %v519
        %v804 = vunpack.c.l.b16 %v520
        %v805 = vunpack.c.l.b16 %v521
        %v806 = vunpack.c.l.b16 %v522
        %v807 = vunpack.c.l.b16 %v523
        %v808 = vunpack.c.l.b16 %v524
        %v809 = vunpack.c.l.b16 %v525
        %v810 = vunpack.c.l.b16 %v526
        %v811 = vunpack.c.l.b16 %v527
        %v812 = vunpack.c.l.b16 %v528
        %v813 = vunpack.c.l.b16 %v529
        %v814 = vunpack.c.l.b16 %v530
        %v815 = vunpack.c.l.b16 %v531
        %v816 = vunpack.c.l.b16 %v532
        %v817 = vunpack.c.l.b16 %v533
        %v818 = vunpack.c.l.b16 %v534
        %v819 = vunpack.c.l.b16 %v535
        %v820 = vunpack.c.l.b16 %v536
        %v821 = vunpack.c.l.b16 %v537
        %v822 = vunpack.c.l.b16 %v538
        %v823 = vunpack.c.l.b16 %v539
        %v824 = vunpack.c.l.b16 %v540
        %v825 = vunpack.c.l.b16 %v541
        %v826 = vunpack.c.l.b16 %v542
        %v827 = vunpack.c.l.b16 %v543
        %v828 = vunpack.c.l.b16 %v544
        %v829 = vunpack.c.l.b16 %v545
        %v830 = vunpack.c.l.b16 %v546
        %v831 = vunpack.c.l.b16 %v547
        %v832 = vunpack.c.l.b16 %v548
        %v833 = vunpack.c.l.b16 %v549
        %v834 = vunpack.c.l.b16 %v550
        %v835 = vunpack.c.l.b16 %v551
        %v836 = vunpack.c.l.b16 %v552
        %v837 = vunpack.c.l.b16 %v553
        %v838 = vunpack.c.l.b16 %v554
        %v839 = vunpack.c.l.b16 %v555
        %v840 = vunpack.c.l.b16 %v556
        %v841 = vunpack.c.l.b16 %v557
        %v842 = vunpack.c.l.b16 %v558
        %v843 = vunpack.c.l.b16 %v559
        %v844 = vunpack.c.l.b16 %v560
        %v845 = vunpack.c.l.b16 %v561
        %v846 = vunpack.c.l.b16 %v562
        %v847 = vunpack.c.l.b16 %v563
        %v848 = vunpack.c.l.b16 %v564
        %v849 = vunpack.c.l.b16 %v565
        %v850 = vunpack.c.l.b16 %v566
        %v851 = vunpack.c.l.b16 %v567
        %v852 = vunpack.c.l.b16 %v568
        %v853 = vunpack.c.l.b16 %v569
        %v854 = vunpack.c.l.b16 %v570
        %v855 = vunpack.c.l.b16 %v571
        %v856 = vunpack.c.l.b16 %v572
        %v857 = vunpack.c.l.b16 %v573
        %v858 = vunpack.c.l.b16 %v574
        %v859 = vunpack.c.l.b16 %v575
        %v860 = vunpack.c.l.b16 %v576
        %v861 = vunpack.c.l.b16 %v577
        %v862 = vunpack.c.l.b16 %v578
        %v863 = vunpack.c.l.b16 %v579
        %v864 = vunpack.c.l.b16 %v580
        %v865 = vunpack.c.l.b16 %v581
        %v866 = vunpack.c.l.b16 %v582
        %v867 = vunpack.c.l.b16 %v583
        %v868 = vunpack.c.l.b16 %v584
        %v869 = vunpack.c.l.b16 %v585
        %v870 = vunpack.c.l.b16 %v586
        %v871 = vunpack.c.l.b16 %v587
        %v872 = vunpack.c.l.b16 %v588
        %v873 = vunpack.c.l.b16 %v589
        %v874 = vunpack.c.l.b16 %v590
        %v875 = vunpack.c.l.b16 %v591
        %v876 = vunpack.c.l.b16 %v592
        %v877 = vunpack.c.l.b16 %v593
        %v878 = vunpack.c.l.b16 %v594
        %v879 = vunpack.c.l.b16 %v595
        %v880 = vunpack.c.l.b16 %v596
        %v881 = vunpack.c.l.b16 %v597
        %v882 = vunpack.c.l.b16 %v598
        %v883 = vunpack.c.l.b16 %v599
        %v884 = vunpack.c.l.b16 %v600
        %v885 = vunpack.c.l.b16 %v601
        %v886 = vunpack.c.l.b16 %v602
        %v887 = vunpack.c.l.b16 %v603
        %v888 = vunpack.c.l.b16 %v604
        %v889 = vunpack.c.l.b16 %v605
        %v890 = vunpack.c.l.b16 %v606
        %v891 = vunpack.c.l.b16 %v607
        %v892 = vunpack.c.l.b16 %v608
        %v893 = vunpack.c.l.b16 %v609
        %v894 = vunpack.c.l.b16 %v610
        %v895 = vunpack.c.l.b16 %v611
        %v896 = vunpack.c.l.b16 %v612
        %v897 = vunpack.c.l.b16 %v613
        %v898 = vunpack.c.l.b16 %v614
        %v899 = vunpack.c.l.b16 %v615
        %v900 = vunpack.c.l.b16 %v616
        %v901 = vunpack.c.l.b16 %v617
        %v902 = vunpack.c.l.b16 %v618
        %v903 = vunpack.c.l.b16 %v619
        %v904 = vunpack.c.l.b16 %v620
        %v905 = vunpack.c.l.b16 %v621
        %v906 = vunpack.c.l.b16 %v622
        %v907 = vunpack.c.l.b16 %v623
        %v908 = vunpack.c.l.b16 %v624
        %v909 = vunpack.c.l.b16 %v625
        %v910 = vunpack.c.l.b16 %v626
        %v911 = vunpack.c.l.b16 %v627
        %v912 = vunpack.c.l.b16 %v628
        %v913 = vunpack.c.l.b16 %v629
        %v914 = vunpack.c.l.b16 %v630
        %v915 = vunpack.c.l.b16 %v631
        %v916 = vunpack.c.l.b16 %v632
        %v917 = vunpack.c.l.b16 %v633
        %v918 = vunpack.c.l.b16 %v634
        %v919 = vunpack.c.l.b16 %v635
        %v920 = vunpack.c.l.b16 %v636
        %v921 = vpack.c.b16 %v794, %v793
        %v922 = vpack.c.b16 %v796, %v795
        %v923 = vpack.c.b16 %v798, %v797
        %v924 = vpack.c.b16 %v800, %v799
        %v925 = vpack.c.b16 %v802, %v801
        %v926 = vpack.c.b16 %v804, %v803
        %v927 = vpack.c.b16 %v806, %v805
        %v928 = vpack.c.b16 %v808, %v807
        %v929 = vpack.c.b16 %v810, %v809
        %v930 = vpack.c.b16 %v812, %v811
        %v931 = vpack.c.b16 %v814, %v813
        %v932 = vpack.c.b16 %v816, %v815
        %v933 = vpack.c.b16 %v818, %v817
        %v934 = vpack.c.b16 %v820, %v819
        %v935 = vpack.c.b16 %v822, %v821
        %v936 = vpack.c.b16 %v824, %v823
        %v937 = vpack.c.b16 %v826, %v825
        %v938 = vpack.c.b16 %v828, %v827
        %v939 = vpack.c.b16 %v830, %v829
        %v940 = vpack.c.b16 %v832, %v831
        %v941 = vpack.c.b16 %v834, %v833
        %v942 = vpack.c.b16 %v836, %v835
        %v943 = vpack.c.b16 %v838, %v837
        %v944 = vpack.c.b16 %v840, %v839
        %v945 = vpack.c.b16 %v842, %v841
        %v946 = vpack.c.b16 %v844, %v843
        %v947 = vpack.c.b16 %v846, %v845
        %v948 = vpack.c.b16 %v848, %v847
        %v949 = vpack.c.b16 %v850, %v849
        %v950 = vpack.c.b16 %v852, %v851
        %v951 = vpack.c.b16 %v854, %v853
        %v952 = vpack.c.b16 %v856, %v855
        %v953 = vpack.c.b16 %v858, %v857
        %v954 = vpack.c.b16 %v860, %v859
        %v955 = vpack.c.b16 %v862, %v861
        %v956 = vpack.c.b16 %v864, %v863
        %v957 = vpack.c.b16 %v866, %v865
        %v958 = vpack.c.b16 %v868, %v867
        %v959 = vpack.c.b16 %v870, %v869
        %v960 = vpack.c.b16 %v872, %v871
        %v961 = vpack.c.b16 %v874, %v873
        %v962 = vpack.c.b16 %v876, %v875
        %v963 = vpack.c.b16 %v878, %v877
        %v964 = vpack.c.b16 %v880, %v879
        %v965 = vpack.c.b16 %v882, %v881
        %v966 = vpack.c.b16 %v884, %v883
        %v967 = vpack.c.b16 %v886, %v885
        %v968 = vpack.c.b16 %v888, %v887
        %v969 = vpack.c.b16 %v890, %v889
        %v970 = vpack.c.b16 %v892, %v891
        %v971 = vpack.c.b16 %v894, %v893
        %v972 = vpack.c.b16 %v896, %v895
        %v973 = vpack.c.b16 %v898, %v897
        %v974 = vpack.c.b16 %v900, %v899
        %v975 = vpack.c.b16 %v902, %v901
        %v976 = vpack.c.b16 %v904, %v903
        %v977 = vpack.c.b16 %v906, %v905
        %v978 = vpack.c.b16 %v908, %v907
        %v979 = vpack.c.b16 %v910, %v909
        %v980 = vpack.c.b16 %v912, %v911
        %v981 = vpack.c.b16 %v914, %v913
        %v982 = vpack.c.b16 %v916, %v915
        %v983 = vpack.c.b16 %v918, %v917
        %v984 = vpack.c.b16 %v920, %v919
        %1049 = vmatprep.subr.bf16.mxu0 0
        %1050 = vmatpush1.bf16.msra.mxu0 %v921
        %1051 = vmatprep.subr.bf16.mxu0 0
        %1052 = vmatpush1.bf16.msra.mxu0 %v922
        %1053 = vmatprep.subr.bf16.mxu0 0
        %1054 = vmatpush1.bf16.msra.mxu0 %v923
        %1055 = vmatprep.subr.bf16.mxu0 0
        %1056 = vmatpush1.bf16.msra.mxu0 %v924
        %1057 = vmatprep.subr.bf16.mxu0 0
        %1058 = vmatpush1.bf16.msra.mxu0 %v925
        %1059 = vmatprep.subr.bf16.mxu0 0
        %1060 = vmatpush1.bf16.msra.mxu0 %v926
        %1061 = vmatprep.subr.bf16.mxu0 0
        %1062 = vmatpush1.bf16.msra.mxu0 %v927
        %1063 = vmatprep.subr.bf16.mxu0 0
        %1064 = vmatpush1.bf16.msra.mxu0 %v928
        %1065 = vmatprep.subr.bf16.mxu0 0
        %1066 = vmatpush1.bf16.msra.mxu0 %v929
        %1067 = vmatprep.subr.bf16.mxu0 0
        %1068 = vmatpush1.bf16.msra.mxu0 %v930
        %1069 = vmatprep.subr.bf16.mxu0 0
        %1070 = vmatpush1.bf16.msra.mxu0 %v931
        %1071 = vmatprep.subr.bf16.mxu0 0
        %1072 = vmatpush1.bf16.msra.mxu0 %v932
        %1073 = vmatprep.subr.bf16.mxu0 0
        %1074 = vmatpush1.bf16.msra.mxu0 %v933
        %1075 = vmatprep.subr.bf16.mxu0 0
        %1076 = vmatpush1.bf16.msra.mxu0 %v934
        %1077 = vmatprep.subr.bf16.mxu0 0
        %1078 = vmatpush1.bf16.msra.mxu0 %v935
        %1079 = vmatprep.subr.bf16.mxu0 0
        %1080 = vmatpush1.bf16.msra.mxu0 %v936
        %1081 = vmatprep.mubr.bf16.mxu0 %v650
        %1082 = vmatmul.mubr.bf16.gmra.mrb[0].mxu0 %v649
        %v1083 = vpop.f32.mrb[0].mxu0
        %v1084 = vadd.f32 0.0, %v1083
        %v1085 = vpop.f32.mrb[0].mxu0
        %v1086 = vpop.f32.mrb[0].mxu0
        %v1087 = vpop.f32.mrb[0].mxu0
        %1088 = vdwg.mxu0
        %1089 = vmatprep.subr.bf16.mxu0 0
        %1090 = vmatpush1.bf16.msra.mxu0 %v937
        %1091 = vmatprep.subr.bf16.mxu0 0
        %1092 = vmatpush1.bf16.msra.mxu0 %v938
        %1093 = vmatprep.subr.bf16.mxu0 0
        %1094 = vmatpush1.bf16.msra.mxu0 %v939
        %1095 = vmatprep.subr.bf16.mxu0 0
        %1096 = vmatpush1.bf16.msra.mxu0 %v940
        %1097 = vmatprep.subr.bf16.mxu0 0
        %1098 = vmatpush1.bf16.msra.mxu0 %v941
        %1099 = vmatprep.subr.bf16.mxu0 0
        %1100 = vmatpush1.bf16.msra.mxu0 %v942
        %1101 = vmatprep.subr.bf16.mxu0 0
        %1102 = vmatpush1.bf16.msra.mxu0 %v943
        %1103 = vmatprep.subr.bf16.mxu0 0
        %1104 = vmatpush1.bf16.msra.mxu0 %v944
        %1105 = vmatprep.subr.bf16.mxu0 0
        %1106 = vmatpush1.bf16.msra.mxu0 %v945
        %1107 = vmatprep.subr.bf16.mxu0 0
        %1108 = vmatpush1.bf16.msra.mxu0 %v946
        %1109 = vmatprep.subr.bf16.mxu0 0
        %1110 = vmatpush1.bf16.msra.mxu0 %v947
        %1111 = vmatprep.subr.bf16.mxu0 0
        %1112 = vmatpush1.bf16.msra.mxu0 %v948
        %1113 = vmatprep.subr.bf16.mxu0 0
        %1114 = vmatpush1.bf16.msra.mxu0 %v949
        %1115 = vmatprep.subr.bf16.mxu0 0
        %1116 = vmatpush1.bf16.msra.mxu0 %v950
        %1117 = vmatprep.subr.bf16.mxu0 0
        %1118 = vmatpush1.bf16.msra.mxu0 %v951
        %1119 = vmatprep.subr.bf16.mxu0 0
        %1120 = vmatpush1.bf16.msra.mxu0 %v952
        %1121 = vmatprep.mubr.bf16.mxu0 %v652
        %1122 = vmatmul.mubr.bf16.gmra.mrb[0].mxu0 %v651
        %v1123 = vpop.f32.mrb[0].mxu0
        %v1124 = vadd.f32 %v1084, %v1123
        %v1125 = vpop.f32.mrb[0].mxu0
        %v1126 = vpop.f32.mrb[0].mxu0
        %v1127 = vpop.f32.mrb[0].mxu0
        %1128 = vdwg.mxu0
        %1129 = vmatprep.subr.bf16.mxu0 0
        %1130 = vmatpush1.bf16.msra.mxu0 %v953
        %1131 = vmatprep.subr.bf16.mxu0 0
        %1132 = vmatpush1.bf16.msra.mxu0 %v954
        %1133 = vmatprep.subr.bf16.mxu0 0
        %1134 = vmatpush1.bf16.msra.mxu0 %v955
        %1135 = vmatprep.subr.bf16.mxu0 0
        %1136 = vmatpush1.bf16.msra.mxu0 %v956
        %1137 = vmatprep.subr.bf16.mxu0 0
        %1138 = vmatpush1.bf16.msra.mxu0 %v957
        %1139 = vmatprep.subr.bf16.mxu0 0
        %1140 = vmatpush1.bf16.msra.mxu0 %v958
        %1141 = vmatprep.subr.bf16.mxu0 0
        %1142 = vmatpush1.bf16.msra.mxu0 %v959
        %1143 = vmatprep.subr.bf16.mxu0 0
        %1144 = vmatpush1.bf16.msra.mxu0 %v960
        %1145 = vmatprep.subr.bf16.mxu0 0
        %1146 = vmatpush1.bf16.msra.mxu0 %v961
        %1147 = vmatprep.subr.bf16.mxu0 0
        %1148 = vmatpush1.bf16.msra.mxu0 %v962
        %1149 = vmatprep.subr.bf16.mxu0 0
        %1150 = vmatpush1.bf16.msra.mxu0 %v963
        %1151 = vmatprep.subr.bf16.mxu0 0
        %1152 = vmatpush1.bf16.msra.mxu0 %v964
        %1153 = vmatprep.subr.bf16.mxu0 0
        %1154 = vmatpush1.bf16.msra.mxu0 %v965
        %1155 = vmatprep.subr.bf16.mxu0 0
        %1156 = vmatpush1.bf16.msra.mxu0 %v966
        %1157 = vmatprep.subr.bf16.mxu0 0
        %1158 = vmatpush1.bf16.msra.mxu0 %v967
        %1159 = vmatprep.subr.bf16.mxu0 0
        %1160 = vmatpush1.bf16.msra.mxu0 %v968
        %1161 = vmatprep.mubr.bf16.mxu0 %v654
        %1162 = vmatmul.mubr.bf16.gmra.mrb[0].mxu0 %v653
        %v1163 = vpop.f32.mrb[0].mxu0
        %v1164 = vadd.f32 %v1124, %v1163
        %v1165 = vpop.f32.mrb[0].mxu0
        %v1166 = vpop.f32.mrb[0].mxu0
        %v1167 = vpop.f32.mrb[0].mxu0
        %1168 = vdwg.mxu0
        %1169 = vmatprep.subr.bf16.mxu0 0
        %1170 = vmatpush1.bf16.msra.mxu0 %v969
        %1171 = vmatprep.subr.bf16.mxu0 0
        %1172 = vmatpush1.bf16.msra.mxu0 %v970
        %1173 = vmatprep.subr.bf16.mxu0 0
        %1174 = vmatpush1.bf16.msra.mxu0 %v971
        %1175 = vmatprep.subr.bf16.mxu0 0
        %1176 = vmatpush1.bf16.msra.mxu0 %v972
        %1177 = vmatprep.subr.bf16.mxu0 0
        %1178 = vmatpush1.bf16.msra.mxu0 %v973
        %1179 = vmatprep.subr.bf16.mxu0 0
        %1180 = vmatpush1.bf16.msra.mxu0 %v974
        %1181 = vmatprep.subr.bf16.mxu0 0
        %1182 = vmatpush1.bf16.msra.mxu0 %v975
        %1183 = vmatprep.subr.bf16.mxu0 0
        %1184 = vmatpush1.bf16.msra.mxu0 %v976
        %1185 = vmatprep.subr.bf16.mxu0 0
        %1186 = vmatpush1.bf16.msra.mxu0 %v977
        %1187 = vmatprep.subr.bf16.mxu0 0
        %1188 = vmatpush1.bf16.msra.mxu0 %v978
        %1189 = vmatprep.subr.bf16.mxu0 0
        %1190 = vmatpush1.bf16.msra.mxu0 %v979
        %1191 = vmatprep.subr.bf16.mxu0 0
        %1192 = vmatpush1.bf16.msra.mxu0 %v980
        %1193 = vmatprep.subr.bf16.mxu0 0
        %1194 = vmatpush1.bf16.msra.mxu0 %v981
        %1195 = vmatprep.subr.bf16.mxu0 0
        %1196 = vmatpush1.bf16.msra.mxu0 %v982
        %1197 = vmatprep.subr.bf16.mxu0 0
        %1198 = vmatpush1.bf16.msra.mxu0 %v983
        %1199 = vmatprep.subr.bf16.mxu0 0
        %1200 = vmatpush1.bf16.msra.mxu0 %v984
        %1201 = vmatprep.mubr.bf16.mxu0 %v656
        %1202 = vmatmul.mubr.bf16.gmra.mrb[0].mxu0 %v655
        %v1203 = vpop.f32.mrb[0].mxu0
        %v1204 = vadd.f32 %v1164, %v1203
        %v1205 = vpop.f32.mrb[0].mxu0
        %v1206 = vpop.f32.mrb[0].mxu0
        %v1207 = vpop.f32.mrb[0].mxu0
        %1208 = vdwg.mxu0
        %v1213 = vunpack.c.l.b16 %v372
        %v1214 = vunpack.c.h.b16 %v372
        %v1215 = vunpack.c.l.b16 %v373
        %v1216 = vunpack.c.h.b16 %v373
        %v1217 = vunpack.c.l.b16 %v374
        %v1218 = vunpack.c.h.b16 %v374
        %v1219 = vunpack.c.l.b16 %v375
        %v1220 = vunpack.c.h.b16 %v375
        %v1221 = vpack.c.b16 %v1213, %v1213
        %v1222 = vpack.c.b16 %v1214, %v1214
        %v1223 = vpack.c.b16 %v1215, %v1215
        %v1224 = vpack.c.b16 %v1216, %v1216
        %v1225 = vpack.c.b16 %v1217, %v1217
        %v1226 = vpack.c.b16 %v1218, %v1218
        %v1227 = vpack.c.b16 %v1219, %v1219
        %v1228 = vpack.c.b16 %v1220, %v1220
        %v1365 = vunpack.c.l.b16 %v376
        %v1366 = vunpack.c.l.b16 %v377
        %v1367 = vunpack.c.l.b16 %v378
        %v1368 = vunpack.c.l.b16 %v379
        %v1369 = vunpack.c.l.b16 %v380
        %v1370 = vunpack.c.l.b16 %v381
        %v1371 = vunpack.c.l.b16 %v382
        %v1372 = vunpack.c.l.b16 %v383
        %v1373 = vunpack.c.l.b16 %v384
        %v1374 = vunpack.c.l.b16 %v385
        %v1375 = vunpack.c.l.b16 %v386
        %v1376 = vunpack.c.l.b16 %v387
        %v1377 = vunpack.c.l.b16 %v388
        %v1378 = vunpack.c.l.b16 %v389
        %v1379 = vunpack.c.l.b16 %v390
        %v1380 = vunpack.c.l.b16 %v391
        %v1381 = vunpack.c.l.b16 %v392
        %v1382 = vunpack.c.l.b16 %v393
        %v1383 = vunpack.c.l.b16 %v394
        %v1384 = vunpack.c.l.b16 %v395
        %v1385 = vunpack.c.l.b16 %v396
        %v1386 = vunpack.c.l.b16 %v397
        %v1387 = vunpack.c.l.b16 %v398
        %v1388 = vunpack.c.l.b16 %v399
        %v1389 = vunpack.c.l.b16 %v400
        %v1390 = vunpack.c.l.b16 %v401
        %v1391 = vunpack.c.l.b16 %v402
        %v1392 = vunpack.c.l.b16 %v403
        %v1393 = vunpack.c.l.b16 %v404
        %v1394 = vunpack.c.l.b16 %v405
        %v1395 = vunpack.c.l.b16 %v406
        %v1396 = vunpack.c.l.b16 %v407
        %v1397 = vunpack.c.l.b16 %v408
        %v1398 = vunpack.c.l.b16 %v409
        %v1399 = vunpack.c.l.b16 %v410
        %v1400 = vunpack.c.l.b16 %v411
        %v1401 = vunpack.c.l.b16 %v412
        %v1402 = vunpack.c.l.b16 %v413
        %v1403 = vunpack.c.l.b16 %v414
        %v1404 = vunpack.c.l.b16 %v415
        %v1405 = vunpack.c.l.b16 %v416
        %v1406 = vunpack.c.l.b16 %v417
        %v1407 = vunpack.c.l.b16 %v418
        %v1408 = vunpack.c.l.b16 %v419
        %v1409 = vunpack.c.l.b16 %v420
        %v1410 = vunpack.c.l.b16 %v421
        %v1411 = vunpack.c.l.b16 %v422
        %v1412 = vunpack.c.l.b16 %v423
        %v1413 = vunpack.c.l.b16 %v424
        %v1414 = vunpack.c.l.b16 %v425
        %v1415 = vunpack.c.l.b16 %v426
        %v1416 = vunpack.c.l.b16 %v427
        %v1417 = vunpack.c.l.b16 %v428
        %v1418 = vunpack.c.l.b16 %v429
        %v1419 = vunpack.c.l.b16 %v430
        %v1420 = vunpack.c.l.b16 %v431
        %v1421 = vunpack.c.l.b16 %v432
        %v1422 = vunpack.c.l.b16 %v433
        %v1423 = vunpack.c.l.b16 %v434
        %v1424 = vunpack.c.l.b16 %v435
        %v1425 = vunpack.c.l.b16 %v436
        %v1426 = vunpack.c.l.b16 %v437
        %v1427 = vunpack.c.l.b16 %v438
        %v1428 = vunpack.c.l.b16 %v439
        %v1429 = vunpack.c.l.b16 %v440
        %v1430 = vunpack.c.l.b16 %v441
        %v1431 = vunpack.c.l.b16 %v442
        %v1432 = vunpack.c.l.b16 %v443
        %v1433 = vunpack.c.l.b16 %v444
        %v1434 = vunpack.c.l.b16 %v445
        %v1435 = vunpack.c.l.b16 %v446
        %v1436 = vunpack.c.l.b16 %v447
        %v1437 = vunpack.c.l.b16 %v448
        %v1438 = vunpack.c.l.b16 %v449
        %v1439 = vunpack.c.l.b16 %v450
        %v1440 = vunpack.c.l.b16 %v451
        %v1441 = vunpack.c.l.b16 %v452
        %v1442 = vunpack.c.l.b16 %v453
        %v1443 = vunpack.c.l.b16 %v454
        %v1444 = vunpack.c.l.b16 %v455
        %v1445 = vunpack.c.l.b16 %v456
        %v1446 = vunpack.c.l.b16 %v457
        %v1447 = vunpack.c.l.b16 %v458
        %v1448 = vunpack.c.l.b16 %v459
        %v1449 = vunpack.c.l.b16 %v460
        %v1450 = vunpack.c.l.b16 %v461
        %v1451 = vunpack.c.l.b16 %v462
        %v1452 = vunpack.c.l.b16 %v463
        %v1453 = vunpack.c.l.b16 %v464
        %v1454 = vunpack.c.l.b16 %v465
        %v1455 = vunpack.c.l.b16 %v466
        %v1456 = vunpack.c.l.b16 %v467
        %v1457 = vunpack.c.l.b16 %v468
        %v1458 = vunpack.c.l.b16 %v469
        %v1459 = vunpack.c.l.b16 %v470
        %v1460 = vunpack.c.l.b16 %v471
        %v1461 = vunpack.c.l.b16 %v472
        %v1462 = vunpack.c.l.b16 %v473
        %v1463 = vunpack.c.l.b16 %v474
        %v1464 = vunpack.c.l.b16 %v475
        %v1465 = vunpack.c.l.b16 %v476
        %v1466 = vunpack.c.l.b16 %v477
        %v1467 = vunpack.c.l.b16 %v478
        %v1468 = vunpack.c.l.b16 %v479
        %v1469 = vunpack.c.l.b16 %v480
        %v1470 = vunpack.c.l.b16 %v481
        %v1471 = vunpack.c.l.b16 %v482
        %v1472 = vunpack.c.l.b16 %v483
        %v1473 = vunpack.c.l.b16 %v484
        %v1474 = vunpack.c.l.b16 %v485
        %v1475 = vunpack.c.l.b16 %v486
        %v1476 = vunpack.c.l.b16 %v487
        %v1477 = vunpack.c.l.b16 %v488
        %v1478 = vunpack.c.l.b16 %v489
        %v1479 = vunpack.c.l.b16 %v490
        %v1480 = vunpack.c.l.b16 %v491
        %v1481 = vunpack.c.l.b16 %v492
        %v1482 = vunpack.c.l.b16 %v493
        %v1483 = vunpack.c.l.b16 %v494
        %v1484 = vunpack.c.l.b16 %v495
        %v1485 = vunpack.c.l.b16 %v496
        %v1486 = vunpack.c.l.b16 %v497
        %v1487 = vunpack.c.l.b16 %v498
        %v1488 = vunpack.c.l.b16 %v499
        %v1489 = vunpack.c.l.b16 %v500
        %v1490 = vunpack.c.l.b16 %v501
        %v1491 = vunpack.c.l.b16 %v502
        %v1492 = vunpack.c.l.b16 %v503
        %v1493 = vpack.c.b16 %v1366, %v1365
        %v1494 = vpack.c.b16 %v1368, %v1367
        %v1495 = vpack.c.b16 %v1370, %v1369
        %v1496 = vpack.c.b16 %v1372, %v1371
        %v1497 = vpack.c.b16 %v1374, %v1373
        %v1498 = vpack.c.b16 %v1376, %v1375
        %v1499 = vpack.c.b16 %v1378, %v1377
        %v1500 = vpack.c.b16 %v1380, %v1379
        %v1501 = vpack.c.b16 %v1382, %v1381
        %v1502 = vpack.c.b16 %v1384, %v1383
        %v1503 = vpack.c.b16 %v1386, %v1385
        %v1504 = vpack.c.b16 %v1388, %v1387
        %v1505 = vpack.c.b16 %v1390, %v1389
        %v1506 = vpack.c.b16 %v1392, %v1391
        %v1507 = vpack.c.b16 %v1394, %v1393
        %v1508 = vpack.c.b16 %v1396, %v1395
        %v1509 = vpack.c.b16 %v1398, %v1397
        %v1510 = vpack.c.b16 %v1400, %v1399
        %v1511 = vpack.c.b16 %v1402, %v1401
        %v1512 = vpack.c.b16 %v1404, %v1403
        %v1513 = vpack.c.b16 %v1406, %v1405
        %v1514 = vpack.c.b16 %v1408, %v1407
        %v1515 = vpack.c.b16 %v1410, %v1409
        %v1516 = vpack.c.b16 %v1412, %v1411
        %v1517 = vpack.c.b16 %v1414, %v1413
        %v1518 = vpack.c.b16 %v1416, %v1415
        %v1519 = vpack.c.b16 %v1418, %v1417
        %v1520 = vpack.c.b16 %v1420, %v1419
        %v1521 = vpack.c.b16 %v1422, %v1421
        %v1522 = vpack.c.b16 %v1424, %v1423
        %v1523 = vpack.c.b16 %v1426, %v1425
        %v1524 = vpack.c.b16 %v1428, %v1427
        %v1525 = vpack.c.b16 %v1430, %v1429
        %v1526 = vpack.c.b16 %v1432, %v1431
        %v1527 = vpack.c.b16 %v1434, %v1433
        %v1528 = vpack.c.b16 %v1436, %v1435
        %v1529 = vpack.c.b16 %v1438, %v1437
        %v1530 = vpack.c.b16 %v1440, %v1439
        %v1531 = vpack.c.b16 %v1442, %v1441
        %v1532 = vpack.c.b16 %v1444, %v1443
        %v1533 = vpack.c.b16 %v1446, %v1445
        %v1534 = vpack.c.b16 %v1448, %v1447
        %v1535 = vpack.c.b16 %v1450, %v1449
        %v1536 = vpack.c.b16 %v1452, %v1451
        %v1537 = vpack.c.b16 %v1454, %v1453
        %v1538 = vpack.c.b16 %v1456, %v1455
        %v1539 = vpack.c.b16 %v1458, %v1457
        %v1540 = vpack.c.b16 %v1460, %v1459
        %v1541 = vpack.c.b16 %v1462, %v1461
        %v1542 = vpack.c.b16 %v1464, %v1463
        %v1543 = vpack.c.b16 %v1466, %v1465
        %v1544 = vpack.c.b16 %v1468, %v1467
        %v1545 = vpack.c.b16 %v1470, %v1469
        %v1546 = vpack.c.b16 %v1472, %v1471
        %v1547 = vpack.c.b16 %v1474, %v1473
        %v1548 = vpack.c.b16 %v1476, %v1475
        %v1549 = vpack.c.b16 %v1478, %v1477
        %v1550 = vpack.c.b16 %v1480, %v1479
        %v1551 = vpack.c.b16 %v1482, %v1481
        %v1552 = vpack.c.b16 %v1484, %v1483
        %v1553 = vpack.c.b16 %v1486, %v1485
        %v1554 = vpack.c.b16 %v1488, %v1487
        %v1555 = vpack.c.b16 %v1490, %v1489
        %v1556 = vpack.c.b16 %v1492, %v1491
        %1621 = vmatprep.subr.bf16.mxu0 0
        %1622 = vmatpush1.bf16.msra.mxu0 %v1493
        %1623 = vmatprep.subr.bf16.mxu0 0
        %1624 = vmatpush1.bf16.msra.mxu0 %v1494
        %1625 = vmatprep.subr.bf16.mxu0 0
        %1626 = vmatpush1.bf16.msra.mxu0 %v1495
        %1627 = vmatprep.subr.bf16.mxu0 0
        %1628 = vmatpush1.bf16.msra.mxu0 %v1496
        %1629 = vmatprep.subr.bf16.mxu0 0
        %1630 = vmatpush1.bf16.msra.mxu0 %v1497
        %1631 = vmatprep.subr.bf16.mxu0 0
        %1632 = vmatpush1.bf16.msra.mxu0 %v1498
        %1633 = vmatprep.subr.bf16.mxu0 0
        %1634 = vmatpush1.bf16.msra.mxu0 %v1499
        %1635 = vmatprep.subr.bf16.mxu0 0
        %1636 = vmatpush1.bf16.msra.mxu0 %v1500
        %1637 = vmatprep.subr.bf16.mxu0 0
        %1638 = vmatpush1.bf16.msra.mxu0 %v1501
        %1639 = vmatprep.subr.bf16.mxu0 0
        %1640 = vmatpush1.bf16.msra.mxu0 %v1502
        %1641 = vmatprep.subr.bf16.mxu0 0
        %1642 = vmatpush1.bf16.msra.mxu0 %v1503
        %1643 = vmatprep.subr.bf16.mxu0 0
        %1644 = vmatpush1.bf16.msra.mxu0 %v1504
        %1645 = vmatprep.subr.bf16.mxu0 0
        %1646 = vmatpush1.bf16.msra.mxu0 %v1505
        %1647 = vmatprep.subr.bf16.mxu0 0
        %1648 = vmatpush1.bf16.msra.mxu0 %v1506
        %1649 = vmatprep.subr.bf16.mxu0 0
        %1650 = vmatpush1.bf16.msra.mxu0 %v1507
        %1651 = vmatprep.subr.bf16.mxu0 0
        %1652 = vmatpush1.bf16.msra.mxu0 %v1508
        %1653 = vmatprep.mubr.bf16.mxu0 %v1222
        %1654 = vmatmul.mubr.bf16.gmra.mrb[0].mxu0 %v1221
        %v1655 = vpop.f32.mrb[0].mxu0
        %v1656 = vadd.f32 %v1204, %v1655
        %v1657 = vpop.f32.mrb[0].mxu0
        %v1658 = vpop.f32.mrb[0].mxu0
        %v1659 = vpop.f32.mrb[0].mxu0
        %1660 = vdwg.mxu0
        %1661 = vmatprep.subr.bf16.mxu0 0
        %1662 = vmatpush1.bf16.msra.mxu0 %v1509
        %1663 = vmatprep.subr.bf16.mxu0 0
        %1664 = vmatpush1.bf16.msra.mxu0 %v1510
        %1665 = vmatprep.subr.bf16.mxu0 0
        %1666 = vmatpush1.bf16.msra.mxu0 %v1511
        %1667 = vmatprep.subr.bf16.mxu0 0
        %1668 = vmatpush1.bf16.msra.mxu0 %v1512
        %1669 = vmatprep.subr.bf16.mxu0 0
        %1670 = vmatpush1.bf16.msra.mxu0 %v1513
        %1671 = vmatprep.subr.bf16.mxu0 0
        %1672 = vmatpush1.bf16.msra.mxu0 %v1514
        %1673 = vmatprep.subr.bf16.mxu0 0
        %1674 = vmatpush1.bf16.msra.mxu0 %v1515
        %1675 = vmatprep.subr.bf16.mxu0 0
        %1676 = vmatpush1.bf16.msra.mxu0 %v1516
        %1677 = vmatprep.subr.bf16.mxu0 0
        %1678 = vmatpush1.bf16.msra.mxu0 %v1517
        %1679 = vmatprep.subr.bf16.mxu0 0
        %1680 = vmatpush1.bf16.msra.mxu0 %v1518
        %1681 = vmatprep.subr.bf16.mxu0 0
        %1682 = vmatpush1.bf16.msra.mxu0 %v1519
        %1683 = vmatprep.subr.bf16.mxu0 0
        %1684 = vmatpush1.bf16.msra.mxu0 %v1520
        %1685 = vmatprep.subr.bf16.mxu0 0
        %1686 = vmatpush1.bf16.msra.mxu0 %v1521
        %1687 = vmatprep.subr.bf16.mxu0 0
        %1688 = vmatpush1.bf16.msra.mxu0 %v1522
        %1689 = vmatprep.subr.bf16.mxu0 0
        %1690 = vmatpush1.bf16.msra.mxu0 %v1523
        %1691 = vmatprep.subr.bf16.mxu0 0
        %1692 = vmatpush1.bf16.msra.mxu0 %v1524
        %1693 = vmatprep.mubr.bf16.mxu0 %v1224
        %1694 = vmatmul.mubr.bf16.gmra.mrb[0].mxu0 %v1223
        %v1695 = vpop.f32.mrb[0].mxu0
        %v1696 = vadd.f32 %v1656, %v1695
        %v1697 = vpop.f32.mrb[0].mxu0
        %v1698 = vpop.f32.mrb[0].mxu0
        %v1699 = vpop.f32.mrb[0].mxu0
        %1700 = vdwg.mxu0
        %1701 = vmatprep.subr.bf16.mxu0 0
        %1702 = vmatpush1.bf16.msra.mxu0 %v1525
        %1703 = vmatprep.subr.bf16.mxu0 0
        %1704 = vmatpush1.bf16.msra.mxu0 %v1526
        %1705 = vmatprep.subr.bf16.mxu0 0
        %1706 = vmatpush1.bf16.msra.mxu0 %v1527
        %1707 = vmatprep.subr.bf16.mxu0 0
        %1708 = vmatpush1.bf16.msra.mxu0 %v1528
        %1709 = vmatprep.subr.bf16.mxu0 0
        %1710 = vmatpush1.bf16.msra.mxu0 %v1529
        %1711 = vmatprep.subr.bf16.mxu0 0
        %1712 = vmatpush1.bf16.msra.mxu0 %v1530
        %1713 = vmatprep.subr.bf16.mxu0 0
        %1714 = vmatpush1.bf16.msra.mxu0 %v1531
        %1715 = vmatprep.subr.bf16.mxu0 0
        %1716 = vmatpush1.bf16.msra.mxu0 %v1532
        %1717 = vmatprep.subr.bf16.mxu0 0
        %1718 = vmatpush1.bf16.msra.mxu0 %v1533
        %1719 = vmatprep.subr.bf16.mxu0 0
        %1720 = vmatpush1.bf16.msra.mxu0 %v1534
        %1721 = vmatprep.subr.bf16.mxu0 0
        %1722 = vmatpush1.bf16.msra.mxu0 %v1535
        %1723 = vmatprep.subr.bf16.mxu0 0
        %1724 = vmatpush1.bf16.msra.mxu0 %v1536
        %1725 = vmatprep.subr.bf16.mxu0 0
        %1726 = vmatpush1.bf16.msra.mxu0 %v1537
        %1727 = vmatprep.subr.bf16.mxu0 0
        %1728 = vmatpush1.bf16.msra.mxu0 %v1538
        %1729 = vmatprep.subr.bf16.mxu0 0
        %1730 = vmatpush1.bf16.msra.mxu0 %v1539
        %1731 = vmatprep.subr.bf16.mxu0 0
        %1732 = vmatpush1.bf16.msra.mxu0 %v1540
        %1733 = vmatprep.mubr.bf16.mxu0 %v1226
        %1734 = vmatmul.mubr.bf16.gmra.mrb[0].mxu0 %v1225
        %v1735 = vpop.f32.mrb[0].mxu0
        %v1736 = vadd.f32 %v1696, %v1735
        %v1737 = vpop.f32.mrb[0].mxu0
        %v1738 = vpop.f32.mrb[0].mxu0
        %v1739 = vpop.f32.mrb[0].mxu0
        %1740 = vdwg.mxu0
        %1741 = vmatprep.subr.bf16.mxu0 0
        %1742 = vmatpush1.bf16.msra.mxu0 %v1541
        %1743 = vmatprep.subr.bf16.mxu0 0
        %1744 = vmatpush1.bf16.msra.mxu0 %v1542
        %1745 = vmatprep.subr.bf16.mxu0 0
        %1746 = vmatpush1.bf16.msra.mxu0 %v1543
        %1747 = vmatprep.subr.bf16.mxu0 0
        %1748 = vmatpush1.bf16.msra.mxu0 %v1544
        %1749 = vmatprep.subr.bf16.mxu0 0
        %1750 = vmatpush1.bf16.msra.mxu0 %v1545
        %1751 = vmatprep.subr.bf16.mxu0 0
        %1752 = vmatpush1.bf16.msra.mxu0 %v1546
        %1753 = vmatprep.subr.bf16.mxu0 0
        %1754 = vmatpush1.bf16.msra.mxu0 %v1547
        %1755 = vmatprep.subr.bf16.mxu0 0
        %1756 = vmatpush1.bf16.msra.mxu0 %v1548
        %1757 = vmatprep.subr.bf16.mxu0 0
        %1758 = vmatpush1.bf16.msra.mxu0 %v1549
        %1759 = vmatprep.subr.bf16.mxu0 0
        %1760 = vmatpush1.bf16.msra.mxu0 %v1550
        %1761 = vmatprep.subr.bf16.mxu0 0
        %1762 = vmatpush1.bf16.msra.mxu0 %v1551
        %1763 = vmatprep.subr.bf16.mxu0 0
        %1764 = vmatpush1.bf16.msra.mxu0 %v1552
        %1765 = vmatprep.subr.bf16.mxu0 0
        %1766 = vmatpush1.bf16.msra.mxu0 %v1553
        %1767 = vmatprep.subr.bf16.mxu0 0
        %1768 = vmatpush1.bf16.msra.mxu0 %v1554
        %1769 = vmatprep.subr.bf16.mxu0 0
        %1770 = vmatpush1.bf16.msra.mxu0 %v1555
        %1771 = vmatprep.subr.bf16.mxu0 0
        %1772 = vmatpush1.bf16.msra.mxu0 %v1556
        %1773 = vmatprep.mubr.bf16.mxu0 %v1228
        %1774 = vmatmul.mubr.bf16.gmra.mrb[0].mxu0 %v1227
        %v1775 = vpop.f32.mrb[0].mxu0
        %v1776 = vadd.f32 %v1736, %v1775
        %v1777 = vpop.f32.mrb[0].mxu0
        %v1778 = vpop.f32.mrb[0].mxu0
        %v1779 = vpop.f32.mrb[0].mxu0
        %1780 = vdwg.mxu0
        %s1781 = scalar_lea.vmem [#allocation6], 32
        %v1782 = vld [vmem:[%s1781] sm:$0xff]
        %v1783 = vld [vmem:[%s1781 + $0x8] sm:$0xff]
        %v1784 = vld [vmem:[%s1781 + $0x10] sm:$0xff]
        %v1785 = vld [vmem:[%s1781 + $0x18] sm:$0xff]
        %s1786 = scalar_lea.vmem %s311, 1024 [#allocation8]
        %v1787 = vld [vmem:[%s1786] sm:$0xf]
        %v1788 = vld [vmem:[%s1786 + $0x4] sm:$0xf]
        %v1789 = vld [vmem:[%s1786 + $0x8] sm:$0xf]
        %v1790 = vld [vmem:[%s1786 + $0xc] sm:$0xf]
        %v1791 = vld [vmem:[%s1786 + $0x10] sm:$0xf]
        %v1792 = vld [vmem:[%s1786 + $0x14] sm:$0xf]
        %v1793 = vld [vmem:[%s1786 + $0x18] sm:$0xf]
        %v1794 = vld [vmem:[%s1786 + $0x1c] sm:$0xf]
        %v1795 = vld [vmem:[%s1786 + $0x20] sm:$0xf]
        %v1796 = vld [vmem:[%s1786 + $0x24] sm:$0xf]
        %v1797 = vld [vmem:[%s1786 + $0x28] sm:$0xf]
        %v1798 = vld [vmem:[%s1786 + $0x2c] sm:$0xf]
        %v1799 = vld [vmem:[%s1786 + $0x30] sm:$0xf]
        %v1800 = vld [vmem:[%s1786 + $0x34] sm:$0xf]
        %v1801 = vld [vmem:[%s1786 + $0x38] sm:$0xf]
        %v1802 = vld [vmem:[%s1786 + $0x3c] sm:$0xf]
        %v1803 = vld [vmem:[%s1786 + $0x40] sm:$0xf]
        %v1804 = vld [vmem:[%s1786 + $0x44] sm:$0xf]
        %v1805 = vld [vmem:[%s1786 + $0x48] sm:$0xf]
        %v1806 = vld [vmem:[%s1786 + $0x4c] sm:$0xf]
        %v1807 = vld [vmem:[%s1786 + $0x50] sm:$0xf]
        %v1808 = vld [vmem:[%s1786 + $0x54] sm:$0xf]
        %v1809 = vld [vmem:[%s1786 + $0x58] sm:$0xf]
        %v1810 = vld [vmem:[%s1786 + $0x5c] sm:$0xf]
        %v1811 = vld [vmem:[%s1786 + $0x60] sm:$0xf]
        %v1812 = vld [vmem:[%s1786 + $0x64] sm:$0xf]
        %v1813 = vld [vmem:[%s1786 + $0x68] sm:$0xf]
        %v1814 = vld [vmem:[%s1786 + $0x6c] sm:$0xf]
        %v1815 = vld [vmem:[%s1786 + $0x70] sm:$0xf]
        %v1816 = vld [vmem:[%s1786 + $0x74] sm:$0xf]
        %v1817 = vld [vmem:[%s1786 + $0x78] sm:$0xf]
        %v1818 = vld [vmem:[%s1786 + $0x7c] sm:$0xf]
        %v1819 = vld [vmem:[%s1786 + $0x80] sm:$0xf]
        %v1820 = vld [vmem:[%s1786 + $0x84] sm:$0xf]
        %v1821 = vld [vmem:[%s1786 + $0x88] sm:$0xf]
        %v1822 = vld [vmem:[%s1786 + $0x8c] sm:$0xf]
        %v1823 = vld [vmem:[%s1786 + $0x90] sm:$0xf]
        %v1824 = vld [vmem:[%s1786 + $0x94] sm:$0xf]
        %v1825 = vld [vmem:[%s1786 + $0x98] sm:$0xf]
        %v1826 = vld [vmem:[%s1786 + $0x9c] sm:$0xf]
        %v1827 = vld [vmem:[%s1786 + $0xa0] sm:$0xf]
        %v1828 = vld [vmem:[%s1786 + $0xa4] sm:$0xf]
        %v1829 = vld [vmem:[%s1786 + $0xa8] sm:$0xf]
        %v1830 = vld [vmem:[%s1786 + $0xac] sm:$0xf]
        %v1831 = vld [vmem:[%s1786 + $0xb0] sm:$0xf]
        %v1832 = vld [vmem:[%s1786 + $0xb4] sm:$0xf]
        %v1833 = vld [vmem:[%s1786 + $0xb8] sm:$0xf]
        %v1834 = vld [vmem:[%s1786 + $0xbc] sm:$0xf]
        %v1835 = vld [vmem:[%s1786 + $0xc0] sm:$0xf]
        %v1836 = vld [vmem:[%s1786 + $0xc4] sm:$0xf]
        %v1837 = vld [vmem:[%s1786 + $0xc8] sm:$0xf]
        %v1838 = vld [vmem:[%s1786 + $0xcc] sm:$0xf]
        %v1839 = vld [vmem:[%s1786 + $0xd0] sm:$0xf]
        %v1840 = vld [vmem:[%s1786 + $0xd4] sm:$0xf]
        %v1841 = vld [vmem:[%s1786 + $0xd8] sm:$0xf]
        %v1842 = vld [vmem:[%s1786 + $0xdc] sm:$0xf]
        %v1843 = vld [vmem:[%s1786 + $0xe0] sm:$0xf]
        %v1844 = vld [vmem:[%s1786 + $0xe4] sm:$0xf]
        %v1845 = vld [vmem:[%s1786 + $0xe8] sm:$0xf]
        %v1846 = vld [vmem:[%s1786 + $0xec] sm:$0xf]
        %v1847 = vld [vmem:[%s1786 + $0xf0] sm:$0xf]
        %v1848 = vld [vmem:[%s1786 + $0xf4] sm:$0xf]
        %v1849 = vld [vmem:[%s1786 + $0xf8] sm:$0xf]
        %v1850 = vld [vmem:[%s1786 + $0xfc] sm:$0xf]
        %v1851 = vld [vmem:[%s1786 + $0x100] sm:$0xf]
        %v1852 = vld [vmem:[%s1786 + $0x104] sm:$0xf]
        %v1853 = vld [vmem:[%s1786 + $0x108] sm:$0xf]
        %v1854 = vld [vmem:[%s1786 + $0x10c] sm:$0xf]
        %v1855 = vld [vmem:[%s1786 + $0x110] sm:$0xf]
        %v1856 = vld [vmem:[%s1786 + $0x114] sm:$0xf]
        %v1857 = vld [vmem:[%s1786 + $0x118] sm:$0xf]
        %v1858 = vld [vmem:[%s1786 + $0x11c] sm:$0xf]
        %v1859 = vld [vmem:[%s1786 + $0x120] sm:$0xf]
        %v1860 = vld [vmem:[%s1786 + $0x124] sm:$0xf]
        %v1861 = vld [vmem:[%s1786 + $0x128] sm:$0xf]
        %v1862 = vld [vmem:[%s1786 + $0x12c] sm:$0xf]
        %v1863 = vld [vmem:[%s1786 + $0x130] sm:$0xf]
        %v1864 = vld [vmem:[%s1786 + $0x134] sm:$0xf]
        %v1865 = vld [vmem:[%s1786 + $0x138] sm:$0xf]
        %v1866 = vld [vmem:[%s1786 + $0x13c] sm:$0xf]
        %v1867 = vld [vmem:[%s1786 + $0x140] sm:$0xf]
        %v1868 = vld [vmem:[%s1786 + $0x144] sm:$0xf]
        %v1869 = vld [vmem:[%s1786 + $0x148] sm:$0xf]
        %v1870 = vld [vmem:[%s1786 + $0x14c] sm:$0xf]
        %v1871 = vld [vmem:[%s1786 + $0x150] sm:$0xf]
        %v1872 = vld [vmem:[%s1786 + $0x154] sm:$0xf]
        %v1873 = vld [vmem:[%s1786 + $0x158] sm:$0xf]
        %v1874 = vld [vmem:[%s1786 + $0x15c] sm:$0xf]
        %v1875 = vld [vmem:[%s1786 + $0x160] sm:$0xf]
        %v1876 = vld [vmem:[%s1786 + $0x164] sm:$0xf]
        %v1877 = vld [vmem:[%s1786 + $0x168] sm:$0xf]
        %v1878 = vld [vmem:[%s1786 + $0x16c] sm:$0xf]
        %v1879 = vld [vmem:[%s1786 + $0x170] sm:$0xf]
        %v1880 = vld [vmem:[%s1786 + $0x174] sm:$0xf]
        %v1881 = vld [vmem:[%s1786 + $0x178] sm:$0xf]
        %v1882 = vld [vmem:[%s1786 + $0x17c] sm:$0xf]
        %v1883 = vld [vmem:[%s1786 + $0x180] sm:$0xf]
        %v1884 = vld [vmem:[%s1786 + $0x184] sm:$0xf]
        %v1885 = vld [vmem:[%s1786 + $0x188] sm:$0xf]
        %v1886 = vld [vmem:[%s1786 + $0x18c] sm:$0xf]
        %v1887 = vld [vmem:[%s1786 + $0x190] sm:$0xf]
        %v1888 = vld [vmem:[%s1786 + $0x194] sm:$0xf]
        %v1889 = vld [vmem:[%s1786 + $0x198] sm:$0xf]
        %v1890 = vld [vmem:[%s1786 + $0x19c] sm:$0xf]
        %v1891 = vld [vmem:[%s1786 + $0x1a0] sm:$0xf]
        %v1892 = vld [vmem:[%s1786 + $0x1a4] sm:$0xf]
        %v1893 = vld [vmem:[%s1786 + $0x1a8] sm:$0xf]
        %v1894 = vld [vmem:[%s1786 + $0x1ac] sm:$0xf]
        %v1895 = vld [vmem:[%s1786 + $0x1b0] sm:$0xf]
        %v1896 = vld [vmem:[%s1786 + $0x1b4] sm:$0xf]
        %v1897 = vld [vmem:[%s1786 + $0x1b8] sm:$0xf]
        %v1898 = vld [vmem:[%s1786 + $0x1bc] sm:$0xf]
        %v1899 = vld [vmem:[%s1786 + $0x1c0] sm:$0xf]
        %v1900 = vld [vmem:[%s1786 + $0x1c4] sm:$0xf]
        %v1901 = vld [vmem:[%s1786 + $0x1c8] sm:$0xf]
        %v1902 = vld [vmem:[%s1786 + $0x1cc] sm:$0xf]
        %v1903 = vld [vmem:[%s1786 + $0x1d0] sm:$0xf]
        %v1904 = vld [vmem:[%s1786 + $0x1d4] sm:$0xf]
        %v1905 = vld [vmem:[%s1786 + $0x1d8] sm:$0xf]
        %v1906 = vld [vmem:[%s1786 + $0x1dc] sm:$0xf]
        %v1907 = vld [vmem:[%s1786 + $0x1e0] sm:$0xf]
        %v1908 = vld [vmem:[%s1786 + $0x1e4] sm:$0xf]
        %v1909 = vld [vmem:[%s1786 + $0x1e8] sm:$0xf]
        %v1910 = vld [vmem:[%s1786 + $0x1ec] sm:$0xf]
        %v1911 = vld [vmem:[%s1786 + $0x1f0] sm:$0xf]
        %v1912 = vld [vmem:[%s1786 + $0x1f4] sm:$0xf]
        %v1913 = vld [vmem:[%s1786 + $0x1f8] sm:$0xf]
        %v1914 = vld [vmem:[%s1786 + $0x1fc] sm:$0xf]
        %v1919 = vunpack.c.l.b16 %v1782
        %v1920 = vunpack.c.h.b16 %v1782
        %v1921 = vunpack.c.l.b16 %v1783
        %v1922 = vunpack.c.h.b16 %v1783
        %v1923 = vunpack.c.l.b16 %v1784
        %v1924 = vunpack.c.h.b16 %v1784
        %v1925 = vunpack.c.l.b16 %v1785
        %v1926 = vunpack.c.h.b16 %v1785
        %v1927 = vpack.c.b16 %v1919, %v1919
        %v1928 = vpack.c.b16 %v1920, %v1920
        %v1929 = vpack.c.b16 %v1921, %v1921
        %v1930 = vpack.c.b16 %v1922, %v1922
        %v1931 = vpack.c.b16 %v1923, %v1923
        %v1932 = vpack.c.b16 %v1924, %v1924
        %v1933 = vpack.c.b16 %v1925, %v1925
        %v1934 = vpack.c.b16 %v1926, %v1926
        %v2071 = vunpack.c.l.b16 %v1787
        %v2072 = vunpack.c.l.b16 %v1788
        %v2073 = vunpack.c.l.b16 %v1789
        %v2074 = vunpack.c.l.b16 %v1790
        %v2075 = vunpack.c.l.b16 %v1791
        %v2076 = vunpack.c.l.b16 %v1792
        %v2077 = vunpack.c.l.b16 %v1793
        %v2078 = vunpack.c.l.b16 %v1794
        %v2079 = vunpack.c.l.b16 %v1795
        %v2080 = vunpack.c.l.b16 %v1796
        %v2081 = vunpack.c.l.b16 %v1797
        %v2082 = vunpack.c.l.b16 %v1798
        %v2083 = vunpack.c.l.b16 %v1799
        %v2084 = vunpack.c.l.b16 %v1800
        %v2085 = vunpack.c.l.b16 %v1801
        %v2086 = vunpack.c.l.b16 %v1802
        %v2087 = vunpack.c.l.b16 %v1803
        %v2088 = vunpack.c.l.b16 %v1804
        %v2089 = vunpack.c.l.b16 %v1805
        %v2090 = vunpack.c.l.b16 %v1806
        %v2091 = vunpack.c.l.b16 %v1807
        %v2092 = vunpack.c.l.b16 %v1808
        %v2093 = vunpack.c.l.b16 %v1809
        %v2094 = vunpack.c.l.b16 %v1810
        %v2095 = vunpack.c.l.b16 %v1811
        %v2096 = vunpack.c.l.b16 %v1812
        %v2097 = vunpack.c.l.b16 %v1813
        %v2098 = vunpack.c.l.b16 %v1814
        %v2099 = vunpack.c.l.b16 %v1815
        %v2100 = vunpack.c.l.b16 %v1816
        %v2101 = vunpack.c.l.b16 %v1817
        %v2102 = vunpack.c.l.b16 %v1818
        %v2103 = vunpack.c.l.b16 %v1819
        %v2104 = vunpack.c.l.b16 %v1820
        %v2105 = vunpack.c.l.b16 %v1821
        %v2106 = vunpack.c.l.b16 %v1822
        %v2107 = vunpack.c.l.b16 %v1823
        %v2108 = vunpack.c.l.b16 %v1824
        %v2109 = vunpack.c.l.b16 %v1825
        %v2110 = vunpack.c.l.b16 %v1826
        %v2111 = vunpack.c.l.b16 %v1827
        %v2112 = vunpack.c.l.b16 %v1828
        %v2113 = vunpack.c.l.b16 %v1829
        %v2114 = vunpack.c.l.b16 %v1830
        %v2115 = vunpack.c.l.b16 %v1831
        %v2116 = vunpack.c.l.b16 %v1832
        %v2117 = vunpack.c.l.b16 %v1833
        %v2118 = vunpack.c.l.b16 %v1834
        %v2119 = vunpack.c.l.b16 %v1835
        %v2120 = vunpack.c.l.b16 %v1836
        %v2121 = vunpack.c.l.b16 %v1837
        %v2122 = vunpack.c.l.b16 %v1838
        %v2123 = vunpack.c.l.b16 %v1839
        %v2124 = vunpack.c.l.b16 %v1840
        %v2125 = vunpack.c.l.b16 %v1841
        %v2126 = vunpack.c.l.b16 %v1842
        %v2127 = vunpack.c.l.b16 %v1843
        %v2128 = vunpack.c.l.b16 %v1844
        %v2129 = vunpack.c.l.b16 %v1845
        %v2130 = vunpack.c.l.b16 %v1846
        %v2131 = vunpack.c.l.b16 %v1847
        %v2132 = vunpack.c.l.b16 %v1848
        %v2133 = vunpack.c.l.b16 %v1849
        %v2134 = vunpack.c.l.b16 %v1850
        %v2135 = vunpack.c.l.b16 %v1851
        %v2136 = vunpack.c.l.b16 %v1852
        %v2137 = vunpack.c.l.b16 %v1853
        %v2138 = vunpack.c.l.b16 %v1854
        %v2139 = vunpack.c.l.b16 %v1855
        %v2140 = vunpack.c.l.b16 %v1856
        %v2141 = vunpack.c.l.b16 %v1857
        %v2142 = vunpack.c.l.b16 %v1858
        %v2143 = vunpack.c.l.b16 %v1859
        %v2144 = vunpack.c.l.b16 %v1860
        %v2145 = vunpack.c.l.b16 %v1861
        %v2146 = vunpack.c.l.b16 %v1862
        %v2147 = vunpack.c.l.b16 %v1863
        %v2148 = vunpack.c.l.b16 %v1864
        %v2149 = vunpack.c.l.b16 %v1865
        %v2150 = vunpack.c.l.b16 %v1866
        %v2151 = vunpack.c.l.b16 %v1867
        %v2152 = vunpack.c.l.b16 %v1868
        %v2153 = vunpack.c.l.b16 %v1869
        %v2154 = vunpack.c.l.b16 %v1870
        %v2155 = vunpack.c.l.b16 %v1871
        %v2156 = vunpack.c.l.b16 %v1872
        %v2157 = vunpack.c.l.b16 %v1873
        %v2158 = vunpack.c.l.b16 %v1874
        %v2159 = vunpack.c.l.b16 %v1875
        %v2160 = vunpack.c.l.b16 %v1876
        %v2161 = vunpack.c.l.b16 %v1877
        %v2162 = vunpack.c.l.b16 %v1878
        %v2163 = vunpack.c.l.b16 %v1879
        %v2164 = vunpack.c.l.b16 %v1880
        %v2165 = vunpack.c.l.b16 %v1881
        %v2166 = vunpack.c.l.b16 %v1882
        %v2167 = vunpack.c.l.b16 %v1883
        %v2168 = vunpack.c.l.b16 %v1884
        %v2169 = vunpack.c.l.b16 %v1885
        %v2170 = vunpack.c.l.b16 %v1886
        %v2171 = vunpack.c.l.b16 %v1887
        %v2172 = vunpack.c.l.b16 %v1888
        %v2173 = vunpack.c.l.b16 %v1889
        %v2174 = vunpack.c.l.b16 %v1890
        %v2175 = vunpack.c.l.b16 %v1891
        %v2176 = vunpack.c.l.b16 %v1892
        %v2177 = vunpack.c.l.b16 %v1893
        %v2178 = vunpack.c.l.b16 %v1894
        %v2179 = vunpack.c.l.b16 %v1895
        %v2180 = vunpack.c.l.b16 %v1896
        %v2181 = vunpack.c.l.b16 %v1897
        %v2182 = vunpack.c.l.b16 %v1898
        %v2183 = vunpack.c.l.b16 %v1899
        %v2184 = vunpack.c.l.b16 %v1900
        %v2185 = vunpack.c.l.b16 %v1901
        %v2186 = vunpack.c.l.b16 %v1902
        %v2187 = vunpack.c.l.b16 %v1903
        %v2188 = vunpack.c.l.b16 %v1904
        %v2189 = vunpack.c.l.b16 %v1905
        %v2190 = vunpack.c.l.b16 %v1906
        %v2191 = vunpack.c.l.b16 %v1907
        %v2192 = vunpack.c.l.b16 %v1908
        %v2193 = vunpack.c.l.b16 %v1909
        %v2194 = vunpack.c.l.b16 %v1910
        %v2195 = vunpack.c.l.b16 %v1911
        %v2196 = vunpack.c.l.b16 %v1912
        %v2197 = vunpack.c.l.b16 %v1913
        %v2198 = vunpack.c.l.b16 %v1914
        %v2199 = vpack.c.b16 %v2072, %v2071
        %v2200 = vpack.c.b16 %v2074, %v2073
        %v2201 = vpack.c.b16 %v2076, %v2075
        %v2202 = vpack.c.b16 %v2078, %v2077
        %v2203 = vpack.c.b16 %v2080, %v2079
        %v2204 = vpack.c.b16 %v2082, %v2081
        %v2205 = vpack.c.b16 %v2084, %v2083
        %v2206 = vpack.c.b16 %v2086, %v2085
        %v2207 = vpack.c.b16 %v2088, %v2087
        %v2208 = vpack.c.b16 %v2090, %v2089
        %v2209 = vpack.c.b16 %v2092, %v2091
        %v2210 = vpack.c.b16 %v2094, %v2093
        %v2211 = vpack.c.b16 %v2096, %v2095
        %v2212 = vpack.c.b16 %v2098, %v2097
        %v2213 = vpack.c.b16 %v2100, %v2099
        %v2214 = vpack.c.b16 %v2102, %v2101
        %v2215 = vpack.c.b16 %v2104, %v2103
        %v2216 = vpack.c.b16 %v2106, %v2105
        %v2217 = vpack.c.b16 %v2108, %v2107
        %v2218 = vpack.c.b16 %v2110, %v2109
        %v2219 = vpack.c.b16 %v2112, %v2111
        %v2220 = vpack.c.b16 %v2114, %v2113
        %v2221 = vpack.c.b16 %v2116, %v2115
        %v2222 = vpack.c.b16 %v2118, %v2117
        %v2223 = vpack.c.b16 %v2120, %v2119
        %v2224 = vpack.c.b16 %v2122, %v2121
        %v2225 = vpack.c.b16 %v2124, %v2123
        %v2226 = vpack.c.b16 %v2126, %v2125
        %v2227 = vpack.c.b16 %v2128, %v2127
        %v2228 = vpack.c.b16 %v2130, %v2129
        %v2229 = vpack.c.b16 %v2132, %v2131
        %v2230 = vpack.c.b16 %v2134, %v2133
        %v2231 = vpack.c.b16 %v2136, %v2135
        %v2232 = vpack.c.b16 %v2138, %v2137
        %v2233 = vpack.c.b16 %v2140, %v2139
        %v2234 = vpack.c.b16 %v2142, %v2141
        %v2235 = vpack.c.b16 %v2144, %v2143
        %v2236 = vpack.c.b16 %v2146, %v2145
        %v2237 = vpack.c.b16 %v2148, %v2147
        %v2238 = vpack.c.b16 %v2150, %v2149
        %v2239 = vpack.c.b16 %v2152, %v2151
        %v2240 = vpack.c.b16 %v2154, %v2153
        %v2241 = vpack.c.b16 %v2156, %v2155
        %v2242 = vpack.c.b16 %v2158, %v2157
        %v2243 = vpack.c.b16 %v2160, %v2159
        %v2244 = vpack.c.b16 %v2162, %v2161
        %v2245 = vpack.c.b16 %v2164, %v2163
        %v2246 = vpack.c.b16 %v2166, %v2165
        %v2247 = vpack.c.b16 %v2168, %v2167
        %v2248 = vpack.c.b16 %v2170, %v2169
        %v2249 = vpack.c.b16 %v2172, %v2171
        %v2250 = vpack.c.b16 %v2174, %v2173
        %v2251 = vpack.c.b16 %v2176, %v2175
        %v2252 = vpack.c.b16 %v2178, %v2177
        %v2253 = vpack.c.b16 %v2180, %v2179
        %v2254 = vpack.c.b16 %v2182, %v2181
        %v2255 = vpack.c.b16 %v2184, %v2183
        %v2256 = vpack.c.b16 %v2186, %v2185
        %v2257 = vpack.c.b16 %v2188, %v2187
        %v2258 = vpack.c.b16 %v2190, %v2189
        %v2259 = vpack.c.b16 %v2192, %v2191
        %v2260 = vpack.c.b16 %v2194, %v2193
        %v2261 = vpack.c.b16 %v2196, %v2195
        %v2262 = vpack.c.b16 %v2198, %v2197
        %2327 = vmatprep.subr.bf16.mxu0 0
        %2328 = vmatpush1.bf16.msra.mxu0 %v2199
        %2329 = vmatprep.subr.bf16.mxu0 0
        %2330 = vmatpush1.bf16.msra.mxu0 %v2200
        %2331 = vmatprep.subr.bf16.mxu0 0
        %2332 = vmatpush1.bf16.msra.mxu0 %v2201
        %2333 = vmatprep.subr.bf16.mxu0 0
        %2334 = vmatpush1.bf16.msra.mxu0 %v2202
        %2335 = vmatprep.subr.bf16.mxu0 0
        %2336 = vmatpush1.bf16.msra.mxu0 %v2203
        %2337 = vmatprep.subr.bf16.mxu0 0
        %2338 = vmatpush1.bf16.msra.mxu0 %v2204
        %2339 = vmatprep.subr.bf16.mxu0 0
        %2340 = vmatpush1.bf16.msra.mxu0 %v2205
        %2341 = vmatprep.subr.bf16.mxu0 0
        %2342 = vmatpush1.bf16.msra.mxu0 %v2206
        %2343 = vmatprep.subr.bf16.mxu0 0
        %2344 = vmatpush1.bf16.msra.mxu0 %v2207
        %2345 = vmatprep.subr.bf16.mxu0 0
        %2346 = vmatpush1.bf16.msra.mxu0 %v2208
        %2347 = vmatprep.subr.bf16.mxu0 0
        %2348 = vmatpush1.bf16.msra.mxu0 %v2209
        %2349 = vmatprep.subr.bf16.mxu0 0
        %2350 = vmatpush1.bf16.msra.mxu0 %v2210
        %2351 = vmatprep.subr.bf16.mxu0 0
        %2352 = vmatpush1.bf16.msra.mxu0 %v2211
        %2353 = vmatprep.subr.bf16.mxu0 0
        %2354 = vmatpush1.bf16.msra.mxu0 %v2212
        %2355 = vmatprep.subr.bf16.mxu0 0
        %2356 = vmatpush1.bf16.msra.mxu0 %v2213
        %2357 = vmatprep.subr.bf16.mxu0 0
        %2358 = vmatpush1.bf16.msra.mxu0 %v2214
        %2359 = vmatprep.mubr.bf16.mxu0 %v1928
        %2360 = vmatmul.mubr.bf16.gmra.mrb[0].mxu0 %v1927
        %v2361 = vpop.f32.mrb[0].mxu0
        %v2362 = vadd.f32 0.0, %v2361
        %v2363 = vpop.f32.mrb[0].mxu0
        %v2364 = vpop.f32.mrb[0].mxu0
        %v2365 = vpop.f32.mrb[0].mxu0
        %2366 = vdwg.mxu0
        %2367 = vmatprep.subr.bf16.mxu0 0
        %2368 = vmatpush1.bf16.msra.mxu0 %v2215
        %2369 = vmatprep.subr.bf16.mxu0 0
        %2370 = vmatpush1.bf16.msra.mxu0 %v2216
        %2371 = vmatprep.subr.bf16.mxu0 0
        %2372 = vmatpush1.bf16.msra.mxu0 %v2217
        %2373 = vmatprep.subr.bf16.mxu0 0
        %2374 = vmatpush1.bf16.msra.mxu0 %v2218
        %2375 = vmatprep.subr.bf16.mxu0 0
        %2376 = vmatpush1.bf16.msra.mxu0 %v2219
        %2377 = vmatprep.subr.bf16.mxu0 0
        %2378 = vmatpush1.bf16.msra.mxu0 %v2220
        %2379 = vmatprep.subr.bf16.mxu0 0
        %2380 = vmatpush1.bf16.msra.mxu0 %v2221
        %2381 = vmatprep.subr.bf16.mxu0 0
        %2382 = vmatpush1.bf16.msra.mxu0 %v2222
        %2383 = vmatprep.subr.bf16.mxu0 0
        %2384 = vmatpush1.bf16.msra.mxu0 %v2223
        %2385 = vmatprep.subr.bf16.mxu0 0
        %2386 = vmatpush1.bf16.msra.mxu0 %v2224
        %2387 = vmatprep.subr.bf16.mxu0 0
        %2388 = vmatpush1.bf16.msra.mxu0 %v2225
        %2389 = vmatprep.subr.bf16.mxu0 0
        %2390 = vmatpush1.bf16.msra.mxu0 %v2226
        %2391 = vmatprep.subr.bf16.mxu0 0
        %2392 = vmatpush1.bf16.msra.mxu0 %v2227
        %2393 = vmatprep.subr.bf16.mxu0 0
        %2394 = vmatpush1.bf16.msra.mxu0 %v2228
        %2395 = vmatprep.subr.bf16.mxu0 0
        %2396 = vmatpush1.bf16.msra.mxu0 %v2229
        %2397 = vmatprep.subr.bf16.mxu0 0
        %2398 = vmatpush1.bf16.msra.mxu0 %v2230
        %2399 = vmatprep.mubr.bf16.mxu0 %v1930
        %2400 = vmatmul.mubr.bf16.gmra.mrb[0].mxu0 %v1929
        %v2401 = vpop.f32.mrb[0].mxu0
        %v2402 = vadd.f32 %v2362, %v2401
        %v2403 = vpop.f32.mrb[0].mxu0
        %v2404 = vpop.f32.mrb[0].mxu0
        %v2405 = vpop.f32.mrb[0].mxu0
        %2406 = vdwg.mxu0
        %2407 = vmatprep.subr.bf16.mxu0 0
        %2408 = vmatpush1.bf16.msra.mxu0 %v2231
        %2409 = vmatprep.subr.bf16.mxu0 0
        %2410 = vmatpush1.bf16.msra.mxu0 %v2232
        %2411 = vmatprep.subr.bf16.mxu0 0
        %2412 = vmatpush1.bf16.msra.mxu0 %v2233
        %2413 = vmatprep.subr.bf16.mxu0 0
        %2414 = vmatpush1.bf16.msra.mxu0 %v2234
        %2415 = vmatprep.subr.bf16.mxu0 0
        %2416 = vmatpush1.bf16.msra.mxu0 %v2235
        %2417 = vmatprep.subr.bf16.mxu0 0
        %2418 = vmatpush1.bf16.msra.mxu0 %v2236
        %2419 = vmatprep.subr.bf16.mxu0 0
        %2420 = vmatpush1.bf16.msra.mxu0 %v2237
        %2421 = vmatprep.subr.bf16.mxu0 0
        %2422 = vmatpush1.bf16.msra.mxu0 %v2238
        %2423 = vmatprep.subr.bf16.mxu0 0
        %2424 = vmatpush1.bf16.msra.mxu0 %v2239
        %2425 = vmatprep.subr.bf16.mxu0 0
        %2426 = vmatpush1.bf16.msra.mxu0 %v2240
        %2427 = vmatprep.subr.bf16.mxu0 0
        %2428 = vmatpush1.bf16.msra.mxu0 %v2241
        %2429 = vmatprep.subr.bf16.mxu0 0
        %2430 = vmatpush1.bf16.msra.mxu0 %v2242
        %2431 = vmatprep.subr.bf16.mxu0 0
        %2432 = vmatpush1.bf16.msra.mxu0 %v2243
        %2433 = vmatprep.subr.bf16.mxu0 0
        %2434 = vmatpush1.bf16.msra.mxu0 %v2244
        %2435 = vmatprep.subr.bf16.mxu0 0
        %2436 = vmatpush1.bf16.msra.mxu0 %v2245
        %2437 = vmatprep.subr.bf16.mxu0 0
        %2438 = vmatpush1.bf16.msra.mxu0 %v2246
        %2439 = vmatprep.mubr.bf16.mxu0 %v1932
        %2440 = vmatmul.mubr.bf16.gmra.mrb[0].mxu0 %v1931
        %v2441 = vpop.f32.mrb[0].mxu0
        %v2442 = vadd.f32 %v2402, %v2441
        %v2443 = vpop.f32.mrb[0].mxu0
        %v2444 = vpop.f32.mrb[0].mxu0
        %v2445 = vpop.f32.mrb[0].mxu0
        %2446 = vdwg.mxu0
        %2447 = vmatprep.subr.bf16.mxu0 0
        %2448 = vmatpush1.bf16.msra.mxu0 %v2247
        %2449 = vmatprep.subr.bf16.mxu0 0
        %2450 = vmatpush1.bf16.msra.mxu0 %v2248
        %2451 = vmatprep.subr.bf16.mxu0 0
        %2452 = vmatpush1.bf16.msra.mxu0 %v2249
        %2453 = vmatprep.subr.bf16.mxu0 0
        %2454 = vmatpush1.bf16.msra.mxu0 %v2250
        %2455 = vmatprep.subr.bf16.mxu0 0
        %2456 = vmatpush1.bf16.msra.mxu0 %v2251
        %2457 = vmatprep.subr.bf16.mxu0 0
        %2458 = vmatpush1.bf16.msra.mxu0 %v2252
        %2459 = vmatprep.subr.bf16.mxu0 0
        %2460 = vmatpush1.bf16.msra.mxu0 %v2253
        %2461 = vmatprep.subr.bf16.mxu0 0
        %2462 = vmatpush1.bf16.msra.mxu0 %v2254
        %2463 = vmatprep.subr.bf16.mxu0 0
        %2464 = vmatpush1.bf16.msra.mxu0 %v2255
        %2465 = vmatprep.subr.bf16.mxu0 0
        %2466 = vmatpush1.bf16.msra.mxu0 %v2256
        %2467 = vmatprep.subr.bf16.mxu0 0
        %2468 = vmatpush1.bf16.msra.mxu0 %v2257
        %2469 = vmatprep.subr.bf16.mxu0 0
        %2470 = vmatpush1.bf16.msra.mxu0 %v2258
        %2471 = vmatprep.subr.bf16.mxu0 0
        %2472 = vmatpush1.bf16.msra.mxu0 %v2259
        %2473 = vmatprep.subr.bf16.mxu0 0
        %2474 = vmatpush1.bf16.msra.mxu0 %v2260
        %2475 = vmatprep.subr.bf16.mxu0 0
        %2476 = vmatpush1.bf16.msra.mxu0 %v2261
        %2477 = vmatprep.subr.bf16.mxu0 0
        %2478 = vmatpush1.bf16.msra.mxu0 %v2262
        %2479 = vmatprep.mubr.bf16.mxu0 %v1934
        %2480 = vmatmul.mubr.bf16.gmra.mrb[0].mxu0 %v1933
        %v2481 = vpop.f32.mrb[0].mxu0
        %v2482 = vadd.f32 %v2442, %v2481
        %v2483 = vpop.f32.mrb[0].mxu0
        %v2484 = vpop.f32.mrb[0].mxu0
        %v2485 = vpop.f32.mrb[0].mxu0
        %2486 = vdwg.mxu0
        %v2487 = vadd.f32 %v1776, %v2482
        %v2488 = vadd.f32 %v371, %v2487
        %2489 = vst [vmem:[#allocation2] sm:$0xff] %v2488
        // Predicated region
        $region65: #{tpu_custom_call.1} parent=39 // pred_check
          %p2490 = pneg %p366
        $region66: #{tpu_custom_call.1} parent=39 // pred_check_branch
          %2492 = sbr.rel (%p2490) target = $region68
        $region67: #{tpu_custom_call.1} parent=39 // pred_region
          %v2493 = vld [vmem:[#allocation2] sm:$0xff]
          %v2494 = vld [vmem:[%s319] sm:$0x1]
          %v2496 = vlaneseq
          %v2497 = vshrl.u32 %v2496, 7
          %v2498 = vsub.s32 0, %v2497
          %v2499 = vrot.slane %v2494, %v2498
          %v2501 = vadd.f32 %v2493, %v2499
          %v2502 = vmax.f32 %v2501, 0.0
          %v2503 = vld [vmem:[%s327] sm:$0x1]
          %v2505 = vlaneseq
          %v2506 = vshrl.u32 %v2505, 7
          %v2507 = vsub.s32 0, %v2506
          %v2508 = vrot.slane %v2503, %v2507
          %v2510 = vmul.f32 %v2502, %v2508
          %2511 = vadd.xlane.f32.xlu0 %v2510
          %v2512 = vpop.xlane.xlu0 %2511
          %v2513 = vrot.slane %v2512, 4
          %v2514 = vadd.f32 %v2512, %v2513
          %v2515 = vrot.slane %v2514, 2
          %v2516 = vadd.f32 %v2514, %v2515
          %v2517 = vrot.slane %v2516, 1
          %v2518 = vadd.f32 %v2516, %v2517
          %s2519 = vtos %v2518
          %v2520 = vstv %s2519
          %2521 = vst [vmem:[%s361] sm:$0xff] %v2520
        $region68: #{tpu_custom_call.1} parent=39 // pred_fallthru
          _
        %s2522 = sand.u32 %s173, 1
        %s2523 = scalar_lea.sflag [#allocation5], %s2522
        %s2524 = sand.u32 %s173, 1
        %s2525 = smul.addr %s2524, 8
        %s2526 = scalar_lea.vmem [#allocation11], %s2525
        // Predicated region
        $region69: #{tpu_custom_call.1} parent=39 // pred_check
          %p2527 = pneg %p183
        $region70: #{tpu_custom_call.1} parent=39 // pred_check_branch
          %2529 = sbr.rel (%p2527) target = $region72
        $region71: #{tpu_custom_call.1} parent=39 // pred_region
          %s2531 = ssub.s32 128, 128
          %2532 = vsyncadd %s2523, %s2531
          %s2533 = smul.addr %s25, 128
          %s2534 = scalar_lea.hbm %s5, %s2533
          %s2536 = sshll.u32 %s2526, 4
          %s2537 = int_to_ptr.vmem [resolvable:$true] %s2536
          %2539 = dma.vmem_to_hbm [thread:$0]  %s2537, 128, %s2534, %s2523
        $region72: #{tpu_custom_call.1} parent=39 // pred_fallthru
          _
      $region40: #{tpu_custom_call.1} parent=5 // pred_fallthru
        _
      %p2540 = scmp.le.s32.totalorder 2, %s16
      // Predicated region
      $region73: #{tpu_custom_call.1} parent=5 // pred_check
        %p2541 = pneg %p2540
      $region74: #{tpu_custom_call.1} parent=5 // pred_check_branch
        %2543 = sbr.rel (%p2541) target = $region76
      $region75: #{tpu_custom_call.1} parent=5 // pred_region
        %s2544 = ssub.s32 %s16, 2
        // Predicated region
        $region77: #{tpu_custom_call.1} parent=75 // pred_check
          %p2545 = pneg %p189
        $region78: #{tpu_custom_call.1} parent=75 // pred_check_branch
          %2547 = sbr.rel (%p2545) target = $region80
        $region79: #{tpu_custom_call.1} parent=75 // pred_region
          %s2548 = sand.u32 %s174, 1
          %s2549 = scalar_lea.sflag [#allocation5], %s2548
          %s2550 = sand.u32 %s174, 1
          %s2551 = smul.addr %s2550, 8
          %s2552 = scalar_lea.vmem [#allocation11], %s2551
          %2553 = dma.done %s2549, 128
        $region80: #{tpu_custom_call.1} parent=75 // pred_fallthru
          _
      $region76: #{tpu_custom_call.1} parent=5 // pred_fallthru
        _
    $region6: #{tpu_custom_call.1} parent=1 // loop_footer
      %s20 = sadd.s32 1, %s16
    $region7: #{tpu_custom_call.1} parent=1 // loop_footer_branch
      %15 = sbr.rel target = $region3
    $region8: #{tpu_custom_call.1} parent=1 // loop_exit
      _
    %2554 = vsyncpa [#allocation4], 1
    %s2555 = scalar_lea.sflag [#allocation4], 1
    %2556 = vsyncpa %s2555, 1
    %2557 = vsyncpa [#allocation7], 1
    %2558 = vsyncpa [#allocation5], 1
    %s2559 = scalar_lea.sflag [#allocation5], 1
    %2560 = vsyncpa %s2559, 1

</llo_original>
